<compile_context>
chip_gen: v7x
topology: tpu7x:2x2x1
jax: 0.10.0
libtpu: 0.0.40
codegen_flags: <defaults>
</compile_context>

<pallas_src>
import functools

import jax
import jax.numpy as jnp
from jax.experimental import pallas as pl
from jax.experimental.pallas import tpu as pltpu


def _mha_kernel(x_ref, wqkv_ref, wpt_ref, bias_ref, o_ref, *,
                seq_len: int, n_heads: int, head_size: int, scale: float):
    """One grid step processes `bblk` whole sequences as an (M, C) row slab.

    x_ref   : (M, C)    input rows, M = bblk * T (lane-dense when C % 128 == 0)
    wqkv_ref: (C, 3C)   fused [Wq^T | Wk^T | Wv^T]   (bf16)
    wpt_ref : (C, C)    Wproj^T                      (bf16)
    bias_ref: (1, C)    proj bias                    (f32)
    o_ref   : (M, C)    output rows
    """
    M, C = x_ref.shape
    T, H, hs = seq_len, n_heads, head_size
    bblk = M // T
    Z = bblk * H                       # independent (sequence, head) problems
    cdt = wqkv_ref.dtype               # bf16 operands, f32 accumulation

    # ---- fused QKV projection: ONE MXU matmul with K = C ---------------------
    x2d = x_ref[...].astype(cdt)       # on-chip cast (no wrapper-side HBM pass)
    qkv = jnp.dot(x2d, wqkv_ref[...],
                  preferred_element_type=jnp.float32)          # (M, 3C) f32
    qkv = qkv.astype(cdt)

    # ---- head split: one reshape + one standard (b,t,h,d)->(b,h,t,d) transpose
    # per tensor (q/k/v are C-wide, lane-tile-aligned slices; no hs-wide slices).
    def split_heads(a2d):                                      # (M, C) -> (Z, T, hs)
        a = a2d.reshape(bblk, T, H, hs)
        a = jnp.transpose(a, (0, 2, 1, 3))                     # (bblk, H, T, hs)
        return a.reshape(Z, T, hs)

    q = split_heads(qkv[:, :C])
    k = split_heads(qkv[:, C:2 * C])
    v = split_heads(qkv[:, 2 * C:])

    # ---- batched causal attention over Z = sequences * heads -----------------
    sims = jnp.einsum('zqd,zkd->zqk', q, k,
                      preferred_element_type=jnp.float32) * scale   # (Z, T, T)

    row = jax.lax.broadcasted_iota(jnp.int32, (T, T), 0)   # causal mask built
    col = jax.lax.broadcasted_iota(jnp.int32, (T, T), 1)   # in-kernel, no tril DMA
    sims = jnp.where((row >= col)[None], sims, jnp.float32(-1e30))

    m = jnp.max(sims, axis=-1, keepdims=True)
    e = jnp.exp(sims - m)
    denom = jnp.sum(e, axis=-1, keepdims=True)
    attn = e * pl.reciprocal(denom, approx=True)            # EUP slot, ~free

    align = jnp.einsum('zqk,zkd->zqd', attn.astype(cdt), v,
                       preferred_element_type=jnp.float32)   # (Z, T, hs) f32

    # ---- output projection: ONE matmul with K = C ----------------------------
    # (b, t, h, d) row-major flatten of the heads IS exactly torch's concat.
    align = jnp.transpose(align.reshape(bblk, H, T, hs), (0, 2, 1, 3))
    concat = align.reshape(M, C).astype(cdt)                 # (M, C)
    out = jnp.dot(concat, wpt_ref[...],
                  preferred_element_type=jnp.float32) + bias_ref[...]
    o_ref[...] = out.astype(o_ref.dtype)


def _pick_seqs_per_block(B: int, T: int, device_kind: str) -> int:
    """Sequences per grid step.

    v5e/v6e have a single TensorCore (the grid is a serial loop): take the
    largest slab whose row count fits the MXU M target (128 rows for v5's
    128x128 MXU, 256 for v6e/v7x's 256x256 MXU) to minimize per-step overhead.
    v7x has 2 TensorCores: additionally prefer a step count that is a multiple
    of 2 so neither core idles on the last iteration.
    """
    kind = device_kind.lower()
    row_cap = 128 if "v5" in kind else 256
    n_cores = 2 if "v7" in kind else 1

    # Block rows must be a multiple of 8 (sublane tile) unless it spans B*T.
    cands = [c for c in range(1, B + 1)
             if B % c == 0 and ((c * T) % 8 == 0 or c == B)]
    fitting = [c for c in cands if c * T <= row_cap] or [min(cands)]
    if n_cores > 1:
        balanced = [c for c in fitting if (B // c) % n_cores == 0]
        if balanced:
            return max(balanced)
    return max(fitting)


def prepare_mha_params(wq, wk, wv, wp, bp, compute_dtype=jnp.bfloat16):
    """One-time (hoisted) weight prep: transpose nn.Linear (out, in) weights to
    (in, out), fuse Q/K/V into a single (C, 3C) matrix, and cast the matmul
    operands to bf16.  Columns inside each C block are head-major (h*hs + d),
    matching the torch view/transpose."""
    C = wq.shape[1]
    wqkv = jnp.concatenate([wq.T, wk.T, wv.T], axis=1).astype(compute_dtype)  # (C, 3C)
    wpt = wp.T.astype(compute_dtype)                                          # (C, C)
    bias = bp.reshape(1, C).astype(jnp.float32)                               # (1, C)
    return wqkv, wpt, bias


@functools.partial(jax.jit, static_argnames=("block_size", "n_heads", "out_dtype"))
def multi_head_v2(x, wqkv, wpt, bias, *, block_size: int, n_heads: int,
                  out_dtype=None):
    """x: (B, T, C) float32.  wqkv/wpt/bias come from prepare_mha_params."""
    B, T, C = x.shape
    assert C % n_heads == 0
    assert T <= block_size
    hs = C // n_heads
    out_dtype = x.dtype if out_dtype is None else out_dtype

    device_kind = jax.devices()[0].device_kind
    bblk = _pick_seqs_per_block(B, T, device_kind)
    grid = (B // bblk,)
    m_blk = bblk * T

    # Lane-dense 2-D I/O: rows = B*T, minor = C.  No wrapper-side dtype cast —
    # the kernel casts x to bf16 on-chip.
    x2d = x.reshape(B * T, C)

    kernel = functools.partial(
        _mha_kernel, seq_len=T, n_heads=n_heads, head_size=hs,
        scale=C ** (-0.5))    # module scales by embed_size, not head_size

    out2d = pl.pallas_call(
        kernel,
        out_shape=jax.ShapeDtypeStruct((B * T, C), out_dtype),
        grid=grid,
        in_specs=[
            pl.BlockSpec((m_blk, C), lambda i: (i, 0)),    # x row slab
            pl.BlockSpec((C, 3 * C), lambda i: (0, 0)),    # fused Wqkv^T (grid-invariant)
            pl.BlockSpec((C, C), lambda i: (0, 0)),        # Wproj^T      (grid-invariant)
            pl.BlockSpec((1, C), lambda i: (0, 0)),        # proj bias    (grid-invariant)
        ],
        out_specs=pl.BlockSpec((m_blk, C), lambda i: (i, 0)),
        compiler_params=pltpu.CompilerParams(
            dimension_semantics=("parallel",)),
    )(x2d, wqkv, wpt, bias)
    return out2d.reshape(B, T, C)


def _reference(x, wq, wk, wv, wp, bp, *, n_heads: int):
    """Pure-JAX f32 reference mirroring the PyTorch forward, for validation."""
    B, T, C = x.shape
    hs = C // n_heads
    q = x @ wq.T
    k = x @ wk.T
    v = x @ wv.T
    q = q.reshape(B, T, n_heads, hs).transpose(0, 2, 1, 3)
    k = k.reshape(B, T, n_heads, hs).transpose(0, 2, 1, 3)
    v = v.reshape(B, T, n_heads, hs).transpose(0, 2, 1, 3)
    sims = jnp.einsum('bhtd,bhsd->bhts', q, k) * C ** (-0.5)
    tril = jnp.tril(jnp.ones((T, T)))
    sims = jnp.where(tril == 0, -jnp.inf, sims)
    attn = jax.nn.softmax(sims, axis=-1)
    out = jnp.einsum('bhts,bhsd->bhtd', attn, v)
    out = out.transpose(0, 2, 1, 3).reshape(B, T, C)
    return out @ wp.T + bp


if __name__ == "__main__":
    # Small, module-consistent shapes.  C is a multiple of 128 so all blocks
    # are lane-dense (unmasked vld/vst), matching real model sizes.
    block_size = 8     # T
    embed_size = 128   # C
    n_heads = 4        # head_size = 32
    B, T, C = 2, block_size, embed_size

    key = jax.random.PRNGKey(0)
    kx, kq, kk, kv, kp, kb = jax.random.split(key, 6)

    x = jax.random.normal(kx, (B, T, C), dtype=jnp.float32)
    # nn.Linear weight layout: (out_features, in_features)
    wq = jax.random.normal(kq, (C, C), dtype=jnp.float32) * 0.05
    wk = jax.random.normal(kk, (C, C), dtype=jnp.float32) * 0.05
    wv = jax.random.normal(kv, (C, C), dtype=jnp.float32) * 0.05
    wp = jax.random.normal(kp, (C, C), dtype=jnp.float32) * 0.05
    bp = jax.random.normal(kb, (C,), dtype=jnp.float32) * 0.05

    # Hoisted one-time weight preparation (transpose / fuse / cast).
    wqkv, wpt, bias = prepare_mha_params(wq, wk, wv, wp, bp)

    out = multi_head_v2(x, wqkv, wpt, bias,
                        block_size=block_size, n_heads=n_heads)
    out = jax.block_until_ready(out)

    ref = _reference(x, wq, wk, wv, wp, bp, n_heads=n_heads)
    assert out.shape == (B, T, C)
    max_err = float(jnp.max(jnp.abs(out - ref)))
    # bf16 operands + approx reciprocal => looser tolerance than pure f32.
    assert jnp.allclose(out, ref, atol=3e-2, rtol=3e-2), f"max abs err {max_err}"
    print("KERNEL_OK")
</pallas_src>

<mosaic_0001>
module attributes {stable_mosaic.version = 11 : i64} {
  func.func @_mha_kernel(%arg0: i32, %arg1: memref<16x128xf32, #tpu.memory_space<vmem>>, %arg2: memref<128x384xbf16, #tpu.memory_space<vmem>>, %arg3: memref<128x128xbf16, #tpu.memory_space<vmem>>, %arg4: memref<1x128xf32, #tpu.memory_space<vmem>>, %arg5: memref<16x128xf32, #tpu.memory_space<vmem>>) attributes {dimension_semantics = [#tpu.dimension_semantics<parallel>], iteration_bounds = array<i64: 1>, scalar_prefetch = 0 : i64, scratch_operands = 0 : i64, tpu.core_type = #tpu.core_type<tc>, window_params = [{transform_indices = @transform_0, window_bounds = array<i64: 16, 128>}, {pipeline_mode = #tpu.pipeline_mode<synchronous>, transform_indices = @transform_1, window_bounds = array<i64: 128, 384>}, {pipeline_mode = #tpu.pipeline_mode<synchronous>, transform_indices = @transform_2, window_bounds = array<i64: 128, 128>}, {pipeline_mode = #tpu.pipeline_mode<synchronous>, transform_indices = @transform_3, window_bounds = array<i64: 1, 128>}, {transform_indices = @transform_4, window_bounds = array<i64: 16, 128>}]} {
    %c0 = arith.constant 0 : index
    %c0_0 = arith.constant 0 : index
    %0 = vector.load %arg1[%c0, %c0_0] : memref<16x128xf32, #tpu.memory_space<vmem>>, vector<16x128xf32>
    %1 = arith.truncf %0 : vector<16x128xf32> to vector<16x128xbf16>
    %c0_1 = arith.constant 0 : index
    %c0_2 = arith.constant 0 : index
    %2 = vector.load %arg2[%c0_1, %c0_2] : memref<128x384xbf16, #tpu.memory_space<vmem>>, vector<128x384xbf16>
    %cst = arith.constant dense<0.000000e+00> : vector<16x384xf32>
    %3 = tpu.matmul %1, %2, %cst {dimension_numbers = #tpu.dot_dimension_numbers<[1], [0], [0], [1], [0, 0, 1, 1], [], []>} : vector<16x128xbf16>, vector<128x384xbf16>, vector<16x384xf32> -> vector<16x384xf32>
    %4 = arith.truncf %3 : vector<16x384xf32> to vector<16x384xbf16>
    %5 = vector.extract_strided_slice %4 {offsets = [0, 0], sizes = [16, 128], strides = [1, 1]} : vector<16x384xbf16> to vector<16x128xbf16>
    %6 = vector.shape_cast %5 : vector<16x128xbf16> to vector<2x8x4x32xbf16>
    %7 = tpu.transpose %6, [0, 2, 1, 3] : vector<2x8x4x32xbf16> -> vector<2x4x8x32xbf16>
    %8 = vector.shape_cast %7 : vector<2x4x8x32xbf16> to vector<8x8x32xbf16>
    %9 = vector.extract_strided_slice %4 {offsets = [0, 128], sizes = [16, 128], strides = [1, 1]} : vector<16x384xbf16> to vector<16x128xbf16>
    %10 = vector.shape_cast %9 : vector<16x128xbf16> to vector<2x8x4x32xbf16>
    %11 = tpu.transpose %10, [0, 2, 1, 3] : vector<2x8x4x32xbf16> -> vector<2x4x8x32xbf16>
    %12 = vector.shape_cast %11 : vector<2x4x8x32xbf16> to vector<8x8x32xbf16>
    %13 = vector.extract_strided_slice %4 {offsets = [0, 256], sizes = [16, 128], strides = [1, 1]} : vector<16x384xbf16> to vector<16x128xbf16>
    %14 = vector.shape_cast %13 : vector<16x128xbf16> to vector<2x8x4x32xbf16>
    %15 = tpu.transpose %14, [0, 2, 1, 3] : vector<2x8x4x32xbf16> -> vector<2x4x8x32xbf16>
    %16 = vector.shape_cast %15 : vector<2x4x8x32xbf16> to vector<8x8x32xbf16>
    "tpu.trace_start"() <{level = 10 : i32, message = "zqd,zkd->zqk"}> : () -> ()
    %cst_3 = arith.constant dense<0.000000e+00> : vector<8x8x8xf32>
    %17 = tpu.matmul %8, %12, %cst_3 {dimension_numbers = #tpu.dot_dimension_numbers<[2], [2], [1], [1], [0, 0, 0, 1, 1, 1], [0], [0]>} : vector<8x8x32xbf16>, vector<8x8x32xbf16>, vector<8x8x8xf32> -> vector<8x8x8xf32>
    "tpu.trace_stop"() : () -> ()
    %cst_4 = arith.constant 0.0883883461 : f32
    %18 = vector.broadcast %cst_4 : f32 to vector<8x8x8xf32>
    %19 = arith.mulf %17, %18 : vector<8x8x8xf32>
    %20 = tpu.iota {dimensions = array<i32: 0>} : vector<8x8xi32>
    %21 = tpu.iota {dimensions = array<i32: 1>} : vector<8x8xi32>
    %22 = arith.cmpi sge, %20, %21 : vector<8x8xi32>
    %23 = vector.shape_cast %22 : vector<8x8xi1> to vector<1x8x8xi1>
    %cst_5 = arith.constant -1.000000e+30 : f32
    %24 = vector.shape_cast %23 : vector<1x8x8xi1> to vector<1x8x8xi1>
    %25 = vector.broadcast %24 : vector<1x8x8xi1> to vector<8x8x8xi1>
    %26 = vector.broadcast %cst_5 : f32 to vector<8x8x8xf32>
    %27 = arith.select %25, %19, %26 : vector<8x8x8xi1>, vector<8x8x8xf32>
    %cst_6 = arith.constant dense<0xFF800000> : vector<8x8xf32>
    %28 = vector.multi_reduction <maximumf>, %27, %cst_6 [2] : vector<8x8x8xf32> to vector<8x8xf32>
    %29 = vector.shape_cast %28 : vector<8x8xf32> to vector<8x8x1xf32>
    %30 = vector.broadcast %29 : vector<8x8x1xf32> to vector<8x8x8xf32>
    %31 = arith.subf %27, %30 : vector<8x8x8xf32>
    %32 = math.exp %31 : vector<8x8x8xf32>
    %cst_7 = arith.constant dense<0.000000e+00> : vector<8x8xf32>
    %33 = vector.multi_reduction <add>, %32, %cst_7 [2] : vector<8x8x8xf32> to vector<8x8xf32>
    %34 = vector.shape_cast %33 : vector<8x8xf32> to vector<8x8x1xf32>
    %35 = tpu.reciprocal %34 {approx = true} : vector<8x8x1xf32> -> vector<8x8x1xf32>
    %36 = vector.broadcast %35 : vector<8x8x1xf32> to vector<8x8x8xf32>
    %37 = arith.mulf %32, %36 : vector<8x8x8xf32>
    %38 = arith.truncf %37 : vector<8x8x8xf32> to vector<8x8x8xbf16>
    "tpu.trace_start"() <{level = 10 : i32, message = "zqk,zkd->zqd"}> : () -> ()
    %cst_8 = arith.constant dense<0.000000e+00> : vector<8x8x32xf32>
    %39 = tpu.matmul %38, %16, %cst_8 {dimension_numbers = #tpu.dot_dimension_numbers<[2], [1], [1], [2], [0, 0, 0, 1, 1, 2], [0], [0]>} : vector<8x8x8xbf16>, vector<8x8x32xbf16>, vector<8x8x32xf32> -> vector<8x8x32xf32>
    "tpu.trace_stop"() : () -> ()
    %40 = vector.shape_cast %39 : vector<8x8x32xf32> to vector<2x4x8x32xf32>
    %41 = tpu.transpose %40, [0, 2, 1, 3] : vector<2x4x8x32xf32> -> vector<2x8x4x32xf32>
    %42 = vector.shape_cast %41 : vector<2x8x4x32xf32> to vector<16x128xf32>
    %43 = arith.truncf %42 : vector<16x128xf32> to vector<16x128xbf16>
    %c0_9 = arith.constant 0 : index
    %c0_10 = arith.constant 0 : index
    %44 = vector.load %arg3[%c0_9, %c0_10] : memref<128x128xbf16, #tpu.memory_space<vmem>>, vector<128x128xbf16>
    %cst_11 = arith.constant dense<0.000000e+00> : vector<16x128xf32>
    %45 = tpu.matmul %43, %44, %cst_11 {dimension_numbers = #tpu.dot_dimension_numbers<[1], [0], [0], [1], [0, 0, 1, 1], [], []>} : vector<16x128xbf16>, vector<128x128xbf16>, vector<16x128xf32> -> vector<16x128xf32>
    %c0_12 = arith.constant 0 : index
    %c0_13 = arith.constant 0 : index
    %46 = vector.load %arg4[%c0_12, %c0_13] : memref<1x128xf32, #tpu.memory_space<vmem>>, vector<1x128xf32>
    %47 = vector.broadcast %46 : vector<1x128xf32> to vector<16x128xf32>
    %48 = arith.addf %45, %47 : vector<16x128xf32>
    %c0_14 = arith.constant 0 : index
    %c0_15 = arith.constant 0 : index
    %49 = vector.load %arg5[%c0_14, %c0_15] : memref<16x128xf32, #tpu.memory_space<vmem>>, vector<16x128xf32>
    tpu.vector_store %arg5[%c0_14, %c0_15], %48 {strides = array<i32>} : memref<16x128xf32, #tpu.memory_space<vmem>>, vector<16x128xf32>,
    return
  }
  func.func @transform_0(%arg0: i32) -> (i32, i32) {
    %c0_i32 = arith.constant 0 : i32
    %c0_i32_0 = arith.constant 0 : i32
    return %arg0, %c0_i32 : i32, i32
  }
  func.func @transform_1(%arg0: i32) -> (i32, i32) {
    %c0_i32 = arith.constant 0 : i32
    %c0_i32_0 = arith.constant 0 : i32
    %c0_i32_1 = arith.constant 0 : i32
    return %c0_i32, %c0_i32_0 : i32, i32
  }
  func.func @transform_2(%arg0: i32) -> (i32, i32) {
    %c0_i32 = arith.constant 0 : i32
    %c0_i32_0 = arith.constant 0 : i32
    %c0_i32_1 = arith.constant 0 : i32
    return %c0_i32, %c0_i32_0 : i32, i32
  }
  func.func @transform_3(%arg0: i32) -> (i32, i32) {
    %c0_i32 = arith.constant 0 : i32
    %c0_i32_0 = arith.constant 0 : i32
    %c0_i32_1 = arith.constant 0 : i32
    return %c0_i32, %c0_i32_0 : i32, i32
  }
  func.func @transform_4(%arg0: i32) -> (i32, i32) {
    %c0_i32 = arith.constant 0 : i32
    %c0_i32_0 = arith.constant 0 : i32
    return %arg0, %c0_i32 : i32, i32
  }
}

</mosaic_0001>

<llo_original>
// kernel: multi_head_v2.1
$region0: #{multi_head_v2.1}
  #allocation0 [shape = 'u32[]', space=smem, size = 0x4, offset = 0x4, fixed_abs, tag = 'smem constant byte address 0x4 - core index']
  #allocation1 [shape = 'u32[144,128]{1,0:T(1,128)}', space=vmem, size = 0x12000, scoped, tag = 'internal scratch']
  %s0 = inlined_call_operand.hbm [shape: f32[16,128], index: 0, kind: input, shape index: {}]
  %s1 = inlined_call_operand.hbm [shape: bf16[128,384], index: 1, kind: input, shape index: {}]
  %s2 = inlined_call_operand.hbm [shape: bf16[128,128], index: 2, kind: input, shape index: {}]
  %s3 = inlined_call_operand.vmem [shape: f32[1,128], index: 3, kind: input, shape index: {}]
  %s4 = inlined_call_operand.hbm [shape: f32[16,128], index: 4, kind: output, shape index: {}]
  %s5 = sld [smem:[#allocation0]]
  $region38: #{multi_head_v2.1} parent=0
    _
  %s7 = ssub.s32 1, %s5
  %s8 = scalar_select 0, %s7, %s5
  $region1: #{multi_head_v2.1} parent=0
    #allocation2 [shape = 'u8[8192]{0}', space=vmem, size = 0x2000, scoped, tag = 'input window, operand 0, single buffered']
    #allocation3 [shape = 's32[1]{0}', space=sflag, size = 0x4, scoped, tag = 'scoped memory for multi_head_v2.1']
    #allocation4 [shape = 's32[1]{0}', space=sflag, size = 0x4, scoped, tag = 'scoped memory for multi_head_v2.1']
    #allocation5 [shape = 'u8[98304]{0}', space=vmem, size = 0x18000, scoped, tag = 'input window, operand 1, single buffered']
    #allocation6 [shape = 's32[1]{0}', space=sflag, size = 0x4, scoped, tag = 'scoped memory for multi_head_v2.1']
    #allocation7 [shape = 'u8[32768]{0}', space=vmem, size = 0x8000, scoped, tag = 'input window, operand 2, single buffered']
    #allocation8 [shape = 'u8[8192]{0}', space=vmem, size = 0x2000, scoped, tag = 'output window, operand 0, single buffered']
    %9 = vsyncpa [#allocation3], 0
    %10 = vsyncpa [#allocation6], 0
    %11 = vsyncpa [#allocation4], 0
    // Predicated region
    $region2: #{multi_head_v2.1} parent=1 // pred_check
      _
    $region3: #{multi_head_v2.1} parent=1 // pred_check_branch
      %13 = sbr.rel (0) target = $region5
    $region4: #{multi_head_v2.1} parent=1 // pred_region
      %s15 = ssub.s32 256, 256
      %16 = vsyncadd [#allocation3], %s15
      %s17 = sshll.u32 [#allocation2], 4
      %s18 = int_to_ptr.vmem [resolvable:$true] %s17
      %23 = dma.hbm_to_vmem [thread:$0]  %s0, 256, %s18, [#allocation3], 128, 128, 8
    $region5: #{multi_head_v2.1} parent=1 // pred_fallthru
      _
    // Predicated region
    $region6: #{multi_head_v2.1} parent=1 // pred_check
      _
    $region7: #{multi_head_v2.1} parent=1 // pred_check_branch
      %25 = sbr.rel (0) target = $region9
    $region8: #{multi_head_v2.1} parent=1 // pred_region
      %s27 = ssub.s32 3072, 3072
      %28 = vsyncadd [#allocation6], %s27
      %s29 = sshll.u32 [#allocation5], 4
      %s30 = int_to_ptr.vmem [resolvable:$true] %s29
      %35 = dma.hbm_to_vmem [thread:$0]  %s1, 3072, %s30, [#allocation6], 192, 192, 12
    $region9: #{multi_head_v2.1} parent=1 // pred_fallthru
      _
    // Predicated region
    $region10: #{multi_head_v2.1} parent=1 // pred_check
      _
    $region11: #{multi_head_v2.1} parent=1 // pred_check_branch
      %37 = sbr.rel (0) target = $region13
    $region12: #{multi_head_v2.1} parent=1 // pred_region
      %s39 = ssub.s32 1024, 1024
      %40 = vsyncadd [#allocation6], %s39
      %s41 = sshll.u32 [#allocation7], 4
      %s42 = int_to_ptr.vmem [resolvable:$true] %s41
      %47 = dma.hbm_to_vmem [thread:$0]  %s2, 1024, %s42, [#allocation6], 64, 64, 4
    $region13: #{multi_head_v2.1} parent=1 // pred_fallthru
      _
    // Predicated region
    $region14: #{multi_head_v2.1} parent=1 // pred_check
      _
    $region15: #{multi_head_v2.1} parent=1 // pred_check_branch
      %49 = sbr.rel (0) target = $region17
    $region16: #{multi_head_v2.1} parent=1 // pred_region
      _
    $region17: #{multi_head_v2.1} parent=1 // pred_fallthru
      _
    // Predicated region
    $region18: #{multi_head_v2.1} parent=1 // pred_check
      _
    $region19: #{multi_head_v2.1} parent=1 // pred_check_branch
      %51 = sbr.rel (0) target = $region21
    $region20: #{multi_head_v2.1} parent=1 // pred_region
      %52 = dma.done [#allocation3], 256
    $region21: #{multi_head_v2.1} parent=1 // pred_fallthru
      _
    // Predicated region
    $region22: #{multi_head_v2.1} parent=1 // pred_check
      _
    $region23: #{multi_head_v2.1} parent=1 // pred_check_branch
      %54 = sbr.rel (0) target = $region25
    $region24: #{multi_head_v2.1} parent=1 // pred_region
      %55 = dma.done [#allocation6], 3072
    $region25: #{multi_head_v2.1} parent=1 // pred_fallthru
      _
    // Predicated region
    $region26: #{multi_head_v2.1} parent=1 // pred_check
      _
    $region27: #{multi_head_v2.1} parent=1 // pred_check_branch
      %57 = sbr.rel (0) target = $region29
    $region28: #{multi_head_v2.1} parent=1 // pred_region
      %58 = dma.done [#allocation6], 1024
    $region29: #{multi_head_v2.1} parent=1 // pred_fallthru
      _
    %v60 = vld [vmem:[#allocation2] sm:$0xff]
    %v61 = vld [vmem:[#allocation2 + $0x8] sm:$0xff]
    %v62 = vpack.c.bf16 %v61, %v60
    %v63 = vld [vmem:[#allocation5] sm:$0xff]
    %v64 = vld [vmem:[#allocation5 + $0x8] sm:$0xf]
    %v65 = vld [vmem:[#allocation5 + $0xc] sm:$0xff]
    %v66 = vld [vmem:[#allocation5 + $0x14] sm:$0xf]
    %v67 = vld [vmem:[#allocation5 + $0x18] sm:$0xff]
    %v68 = vld [vmem:[#allocation5 + $0x20] sm:$0xf]
    %v69 = vld [vmem:[#allocation5 + $0x24] sm:$0xff]
    %v70 = vld [vmem:[#allocation5 + $0x2c] sm:$0xf]
    %v71 = vld [vmem:[#allocation5 + $0x30] sm:$0xff]
    %v72 = vld [vmem:[#allocation5 + $0x38] sm:$0xf]
    %v73 = vld [vmem:[#allocation5 + $0x3c] sm:$0xff]
    %v74 = vld [vmem:[#allocation5 + $0x44] sm:$0xf]
    %v75 = vld [vmem:[#allocation5 + $0x48] sm:$0xff]
    %v76 = vld [vmem:[#allocation5 + $0x50] sm:$0xf]
    %v77 = vld [vmem:[#allocation5 + $0x54] sm:$0xff]
    %v78 = vld [vmem:[#allocation5 + $0x5c] sm:$0xf]
    %v79 = vld [vmem:[#allocation5 + $0x60] sm:$0xff]
    %v80 = vld [vmem:[#allocation5 + $0x68] sm:$0xf]
    %v81 = vld [vmem:[#allocation5 + $0x6c] sm:$0xff]
    %v82 = vld [vmem:[#allocation5 + $0x74] sm:$0xf]
    %v83 = vld [vmem:[#allocation5 + $0x78] sm:$0xff]
    %v84 = vld [vmem:[#allocation5 + $0x80] sm:$0xf]
    %v85 = vld [vmem:[#allocation5 + $0x84] sm:$0xff]
    %v86 = vld [vmem:[#allocation5 + $0x8c] sm:$0xf]
    %v87 = vld [vmem:[#allocation5 + $0x90] sm:$0xff]
    %v88 = vld [vmem:[#allocation5 + $0x98] sm:$0xf]
    %v89 = vld [vmem:[#allocation5 + $0x9c] sm:$0xff]
    %v90 = vld [vmem:[#allocation5 + $0xa4] sm:$0xf]
    %v91 = vld [vmem:[#allocation5 + $0xa8] sm:$0xff]
    %v92 = vld [vmem:[#allocation5 + $0xb0] sm:$0xf]
    %v93 = vld [vmem:[#allocation5 + $0xb4] sm:$0xff]
    %v94 = vld [vmem:[#allocation5 + $0xbc] sm:$0xf]
    %v127 = vunpack.c.l.b16 %v63
    %v128 = vunpack.c.h.b16 %v63
    %v129 = vunpack.c.l.b16 %v64
    %v130 = vunpack.c.l.b16 %v65
    %v131 = vunpack.c.h.b16 %v65
    %v132 = vunpack.c.l.b16 %v66
    %v133 = vunpack.c.l.b16 %v67
    %v134 = vunpack.c.h.b16 %v67
    %v135 = vunpack.c.l.b16 %v68
    %v136 = vunpack.c.l.b16 %v69
    %v137 = vunpack.c.h.b16 %v69
    %v138 = vunpack.c.l.b16 %v70
    %v139 = vunpack.c.l.b16 %v71
    %v140 = vunpack.c.h.b16 %v71
    %v141 = vunpack.c.l.b16 %v72
    %v142 = vunpack.c.l.b16 %v73
    %v143 = vunpack.c.h.b16 %v73
    %v144 = vunpack.c.l.b16 %v74
    %v145 = vunpack.c.l.b16 %v75
    %v146 = vunpack.c.h.b16 %v75
    %v147 = vunpack.c.l.b16 %v76
    %v148 = vunpack.c.l.b16 %v77
    %v149 = vunpack.c.h.b16 %v77
    %v150 = vunpack.c.l.b16 %v78
    %v151 = vunpack.c.l.b16 %v79
    %v152 = vunpack.c.h.b16 %v79
    %v153 = vunpack.c.l.b16 %v80
    %v154 = vunpack.c.l.b16 %v81
    %v155 = vunpack.c.h.b16 %v81
    %v156 = vunpack.c.l.b16 %v82
    %v157 = vunpack.c.l.b16 %v83
    %v158 = vunpack.c.h.b16 %v83
    %v159 = vunpack.c.l.b16 %v84
    %v160 = vunpack.c.l.b16 %v85
    %v161 = vunpack.c.h.b16 %v85
    %v162 = vunpack.c.l.b16 %v86
    %v163 = vunpack.c.l.b16 %v87
    %v164 = vunpack.c.h.b16 %v87
    %v165 = vunpack.c.l.b16 %v88
    %v166 = vunpack.c.l.b16 %v89
    %v167 = vunpack.c.h.b16 %v89
    %v168 = vunpack.c.l.b16 %v90
    %v169 = vunpack.c.l.b16 %v91
    %v170 = vunpack.c.h.b16 %v91
    %v171 = vunpack.c.l.b16 %v92
    %v172 = vunpack.c.l.b16 %v93
    %v173 = vunpack.c.h.b16 %v93
    %v174 = vunpack.c.l.b16 %v94
    %v175 = vpack.c.b16 %v130, %v127
    %v176 = vpack.c.b16 %v131, %v128
    %v177 = vpack.c.b16 %v132, %v129
    %v178 = vpack.c.b16 %v136, %v133
    %v179 = vpack.c.b16 %v137, %v134
    %v180 = vpack.c.b16 %v138, %v135
    %v181 = vpack.c.b16 %v142, %v139
    %v182 = vpack.c.b16 %v143, %v140
    %v183 = vpack.c.b16 %v144, %v141
    %v184 = vpack.c.b16 %v148, %v145
    %v185 = vpack.c.b16 %v149, %v146
    %v186 = vpack.c.b16 %v150, %v147
    %v187 = vpack.c.b16 %v154, %v151
    %v188 = vpack.c.b16 %v155, %v152
    %v189 = vpack.c.b16 %v156, %v153
    %v190 = vpack.c.b16 %v160, %v157
    %v191 = vpack.c.b16 %v161, %v158
    %v192 = vpack.c.b16 %v162, %v159
    %v193 = vpack.c.b16 %v166, %v163
    %v194 = vpack.c.b16 %v167, %v164
    %v195 = vpack.c.b16 %v168, %v165
    %v196 = vpack.c.b16 %v172, %v169
    %v197 = vpack.c.b16 %v173, %v170
    %v198 = vpack.c.b16 %v174, %v171
    %223 = vmatprep.subr.bf16.mxu0 %v176
    %224 = vmatpush1.bf16.msra.mxu0 %v175
    %225 = vmatprep.subr.bf16.mxu0 %v179
    %226 = vmatpush1.bf16.msra.mxu0 %v178
    %227 = vmatprep.subr.bf16.mxu0 %v182
    %228 = vmatpush1.bf16.msra.mxu0 %v181
    %229 = vmatprep.subr.bf16.mxu0 %v185
    %230 = vmatpush1.bf16.msra.mxu0 %v184
    %231 = vmatprep.subr.bf16.mxu0 %v188
    %232 = vmatpush1.bf16.msra.mxu0 %v187
    %233 = vmatprep.subr.bf16.mxu0 %v191
    %234 = vmatpush1.bf16.msra.mxu0 %v190
    %235 = vmatprep.subr.bf16.mxu0 %v194
    %236 = vmatpush1.bf16.msra.mxu0 %v193
    %237 = vmatprep.subr.bf16.mxu0 %v197
    %238 = vmatpush1.bf16.msra.mxu0 %v196
    %239 = vmatprep.subr.bf16.mxu0 0
    %240 = vmatpush1.bf16.msra.mxu0 0
    %241 = vmatprep.subr.bf16.mxu0 0
    %242 = vmatpush1.bf16.msra.mxu0 0
    %243 = vmatprep.subr.bf16.mxu0 0
    %244 = vmatpush1.bf16.msra.mxu0 0
    %245 = vmatprep.subr.bf16.mxu0 0
    %246 = vmatpush1.bf16.msra.mxu0 0
    %247 = vmatprep.subr.bf16.mxu0 0
    %248 = vmatpush1.bf16.msra.mxu0 0
    %249 = vmatprep.subr.bf16.mxu0 0
    %250 = vmatpush1.bf16.msra.mxu0 0
    %251 = vmatprep.subr.bf16.mxu0 0
    %252 = vmatpush1.bf16.msra.mxu0 0
    %253 = vmatprep.subr.bf16.mxu0 0
    %254 = vmatpush1.bf16.msra.mxu0 0
    %255 = vmatprep.mubr.bf16.mxu0 0
    %256 = vmatmul.mubr.bf16.gmra.mrb[0].mxu0 %v62
    %v257 = vpop.f32.mrb[0].mxu0
    %v258 = vadd.f32 0.0, %v257
    %v259 = vpop.f32.mrb[0].mxu0
    %v260 = vadd.f32 0.0, %v259
    %v261 = vpop.f32.mrb[0].mxu0
    %v262 = vadd.f32 0.0, %v261
    %v263 = vpop.f32.mrb[0].mxu0
    %v264 = vadd.f32 0.0, %v263
    %265 = vdwg.mxu0
    %266 = vmatprep.subr.bf16.mxu0 0
    %267 = vmatpush1.bf16.msra.mxu0 %v177
    %268 = vmatprep.subr.bf16.mxu0 0
    %269 = vmatpush1.bf16.msra.mxu0 %v180
    %270 = vmatprep.subr.bf16.mxu0 0
    %271 = vmatpush1.bf16.msra.mxu0 %v183
    %272 = vmatprep.subr.bf16.mxu0 0
    %273 = vmatpush1.bf16.msra.mxu0 %v186
    %274 = vmatprep.subr.bf16.mxu0 0
    %275 = vmatpush1.bf16.msra.mxu0 %v189
    %276 = vmatprep.subr.bf16.mxu0 0
    %277 = vmatpush1.bf16.msra.mxu0 %v192
    %278 = vmatprep.subr.bf16.mxu0 0
    %279 = vmatpush1.bf16.msra.mxu0 %v195
    %280 = vmatprep.subr.bf16.mxu0 0
    %281 = vmatpush1.bf16.msra.mxu0 %v198
    %282 = vmatprep.subr.bf16.mxu0 0
    %283 = vmatpush1.bf16.msra.mxu0 0
    %284 = vmatprep.subr.bf16.mxu0 0
    %285 = vmatpush1.bf16.msra.mxu0 0
    %286 = vmatprep.subr.bf16.mxu0 0
    %287 = vmatpush1.bf16.msra.mxu0 0
    %288 = vmatprep.subr.bf16.mxu0 0
    %289 = vmatpush1.bf16.msra.mxu0 0
    %290 = vmatprep.subr.bf16.mxu0 0
    %291 = vmatpush1.bf16.msra.mxu0 0
    %292 = vmatprep.subr.bf16.mxu0 0
    %293 = vmatpush1.bf16.msra.mxu0 0
    %294 = vmatprep.subr.bf16.mxu0 0
    %295 = vmatpush1.bf16.msra.mxu0 0
    %296 = vmatprep.subr.bf16.mxu0 0
    %297 = vmatpush1.bf16.msra.mxu0 0
    %298 = vmatprep.mubr.bf16.mxu0 0
    %299 = vmatmul.mubr.bf16.gmra.mrb[0].mxu0 %v62
    %v300 = vpop.f32.mrb[0].mxu0
    %v301 = vadd.f32 0.0, %v300
    %v302 = vpop.f32.mrb[0].mxu0
    %v303 = vpop.f32.mrb[0].mxu0
    %v304 = vadd.f32 0.0, %v303
    %v305 = vpop.f32.mrb[0].mxu0
    %306 = vdwg.mxu0
    %v307 = vpack.c.bf16 %v262, %v258
    %v308 = vpack.c.bf16 %v264, %v260
    %v309 = vpack.c.bf16 %v304, %v301
    %311 = vrot.lane.b32.xlu0 %v307, 96
    %v312 = vpop.permute.xlu0 %311
    %313 = vrot.lane.b32.xlu0 %v307, 64
    %v314 = vpop.permute.xlu0 %313
    %315 = vrot.lane.b32.xlu0 %v307, 32
    %v316 = vpop.permute.xlu0 %315
    %v319 = vpack.i.b16 %v312, %v307
    %v321 = vshrl.u32 %v307, 16
    %v322 = vshrl.u32 %v312, 16
    %v323 = vpack.i.b16 %v322, %v321
    %v327 = vpack.i.b16 %v316, %v314
    %v329 = vshrl.u32 %v314, 16
    %v330 = vshrl.u32 %v316, 16
    %v331 = vpack.i.b16 %v330, %v329
    %v334 = vpack.i.b16 0, 0
    %v336 = vshrl.u32 0, 16
    %v337 = vpack.i.b16 %v336, %v336
    %v339 = vcombine.high %v319, %v334
    %v341 = vunpack.c.l.s4 1983009808
    %v342 = vunpack.c.0.s8 %v341
    %v343 = vlaneseq
    %v344 = vshrl.u32 %v343, 7
    %v345 = vsub.s32 %v342, %v344
    %v346 = vrot.slane %v319, %v345
    %v348 = vunpack.c.l.s4 1983009808
    %v349 = vunpack.c.0.s8 %v348
    %v350 = vlaneseq
    %v351 = vshrl.u32 %v350, 7
    %v352 = vsub.s32 %v349, %v351
    %v353 = vrot.slane %v339, %v352
    %v354 = vcombine.high %v327, %v334
    %v356 = vunpack.c.l.s4 1983009808
    %v357 = vunpack.c.0.s8 %v356
    %v358 = vlaneseq
    %v359 = vshrl.u32 %v358, 7
    %v360 = vsub.s32 %v357, %v359
    %v361 = vrot.slane %v327, %v360
    %v363 = vunpack.c.l.s4 1983009808
    %v364 = vunpack.c.0.s8 %v363
    %v365 = vlaneseq
    %v366 = vshrl.u32 %v365, 7
    %v367 = vsub.s32 %v364, %v366
    %v368 = vrot.slane %v354, %v367
    %v369 = vcombine.low %v346, %v361
    %v370 = vcombine.high %v346, %v361
    %v372 = vunpack.c.l.s4 1934713408
    %v373 = vunpack.c.0.s8 %v372
    %v374 = vlaneseq
    %v375 = vshrl.u32 %v374, 7
    %v376 = vsub.s32 %v373, %v375
    %v377 = vrot.slane %v369, %v376
    %v379 = vunpack.c.l.s4 1934713408
    %v380 = vunpack.c.0.s8 %v379
    %v381 = vlaneseq
    %v382 = vshrl.u32 %v381, 7
    %v383 = vsub.s32 %v380, %v382
    %v384 = vrot.slane %v370, %v383
    %v385 = vcombine.low %v353, %v368
    %v386 = vcombine.high %v353, %v368
    %v388 = vunpack.c.l.s4 1934713408
    %v389 = vunpack.c.0.s8 %v388
    %v390 = vlaneseq
    %v391 = vshrl.u32 %v390, 7
    %v392 = vsub.s32 %v389, %v391
    %v393 = vrot.slane %v385, %v392
    %v395 = vunpack.c.l.s4 1934713408
    %v396 = vunpack.c.0.s8 %v395
    %v397 = vlaneseq
    %v398 = vshrl.u32 %v397, 7
    %v399 = vsub.s32 %v396, %v398
    %v400 = vrot.slane %v386, %v399
    %v401 = vcombine.high %v377, 0
    %v402 = vcombine.high %v384, 0
    %v403 = vcombine.high %v393, 0
    %v404 = vcombine.high %v400, 0
    %v405 = vcombine.high %v323, %v337
    %v407 = vunpack.c.l.s4 1983009808
    %v408 = vunpack.c.0.s8 %v407
    %v409 = vlaneseq
    %v410 = vshrl.u32 %v409, 7
    %v411 = vsub.s32 %v408, %v410
    %v412 = vrot.slane %v323, %v411
    %v414 = vunpack.c.l.s4 1983009808
    %v415 = vunpack.c.0.s8 %v414
    %v416 = vlaneseq
    %v417 = vshrl.u32 %v416, 7
    %v418 = vsub.s32 %v415, %v417
    %v419 = vrot.slane %v405, %v418
    %v420 = vcombine.high %v331, %v337
    %v422 = vunpack.c.l.s4 1983009808
    %v423 = vunpack.c.0.s8 %v422
    %v424 = vlaneseq
    %v425 = vshrl.u32 %v424, 7
    %v426 = vsub.s32 %v423, %v425
    %v427 = vrot.slane %v331, %v426
    %v429 = vunpack.c.l.s4 1983009808
    %v430 = vunpack.c.0.s8 %v429
    %v431 = vlaneseq
    %v432 = vshrl.u32 %v431, 7
    %v433 = vsub.s32 %v430, %v432
    %v434 = vrot.slane %v420, %v433
    %v435 = vcombine.low %v412, %v427
    %v436 = vcombine.high %v412, %v427
    %v438 = vunpack.c.l.s4 1934713408
    %v439 = vunpack.c.0.s8 %v438
    %v440 = vlaneseq
    %v441 = vshrl.u32 %v440, 7
    %v442 = vsub.s32 %v439, %v441
    %v443 = vrot.slane %v435, %v442
    %v445 = vunpack.c.l.s4 1934713408
    %v446 = vunpack.c.0.s8 %v445
    %v447 = vlaneseq
    %v448 = vshrl.u32 %v447, 7
    %v449 = vsub.s32 %v446, %v448
    %v450 = vrot.slane %v436, %v449
    %v451 = vcombine.low %v419, %v434
    %v452 = vcombine.high %v419, %v434
    %v454 = vunpack.c.l.s4 1934713408
    %v455 = vunpack.c.0.s8 %v454
    %v456 = vlaneseq
    %v457 = vshrl.u32 %v456, 7
    %v458 = vsub.s32 %v455, %v457
    %v459 = vrot.slane %v451, %v458
    %v461 = vunpack.c.l.s4 1934713408
    %v462 = vunpack.c.0.s8 %v461
    %v463 = vlaneseq
    %v464 = vshrl.u32 %v463, 7
    %v465 = vsub.s32 %v462, %v464
    %v466 = vrot.slane %v452, %v465
    %v467 = vcombine.high %v443, 0
    %v468 = vcombine.high %v450, 0
    %v469 = vcombine.high %v459, 0
    %v470 = vcombine.high %v466, 0
    %v471 = vcombine.low %v377, %v384
    %v473 = vunpack.c.l.s4 1983009808
    %v474 = vunpack.c.0.s8 %v473
    %v475 = vlaneseq
    %v476 = vshrl.u32 %v475, 7
    %v477 = vsub.s32 %v474, %v476
    %v478 = vrot.slane %v471, %v477
    %v479 = vcombine.low %v401, %v402
    %v481 = vunpack.c.l.s4 1983009808
    %v482 = vunpack.c.0.s8 %v481
    %v483 = vlaneseq
    %v484 = vshrl.u32 %v483, 7
    %v485 = vsub.s32 %v482, %v484
    %v486 = vrot.slane %v479, %v485
    %v487 = vcombine.low %v478, %v486
    %v489 = vunpack.c.l.s4 1934713408
    %v490 = vunpack.c.0.s8 %v489
    %v491 = vlaneseq
    %v492 = vshrl.u32 %v491, 7
    %v493 = vsub.s32 %v490, %v492
    %v494 = vrot.slane %v487, %v493
    %v495 = vcombine.high %v494, 0
    %v496 = vcombine.low %v443, %v450
    %v498 = vunpack.c.l.s4 1983009808
    %v499 = vunpack.c.0.s8 %v498
    %v500 = vlaneseq
    %v501 = vshrl.u32 %v500, 7
    %v502 = vsub.s32 %v499, %v501
    %v503 = vrot.slane %v496, %v502
    %v504 = vcombine.low %v467, %v468
    %v506 = vunpack.c.l.s4 1983009808
    %v507 = vunpack.c.0.s8 %v506
    %v508 = vlaneseq
    %v509 = vshrl.u32 %v508, 7
    %v510 = vsub.s32 %v507, %v509
    %v511 = vrot.slane %v504, %v510
    %v512 = vcombine.low %v503, %v511
    %v514 = vunpack.c.l.s4 1934713408
    %v515 = vunpack.c.0.s8 %v514
    %v516 = vlaneseq
    %v517 = vshrl.u32 %v516, 7
    %v518 = vsub.s32 %v515, %v517
    %v519 = vrot.slane %v512, %v518
    %v520 = vcombine.high %v519, 0
    %v521 = vcombine.low %v393, %v400
    %v523 = vunpack.c.l.s4 1983009808
    %v524 = vunpack.c.0.s8 %v523
    %v525 = vlaneseq
    %v526 = vshrl.u32 %v525, 7
    %v527 = vsub.s32 %v524, %v526
    %v528 = vrot.slane %v521, %v527
    %v529 = vcombine.low %v403, %v404
    %v531 = vunpack.c.l.s4 1983009808
    %v532 = vunpack.c.0.s8 %v531
    %v533 = vlaneseq
    %v534 = vshrl.u32 %v533, 7
    %v535 = vsub.s32 %v532, %v534
    %v536 = vrot.slane %v529, %v535
    %v537 = vcombine.low %v528, %v536
    %v539 = vunpack.c.l.s4 1934713408
    %v540 = vunpack.c.0.s8 %v539
    %v541 = vlaneseq
    %v542 = vshrl.u32 %v541, 7
    %v543 = vsub.s32 %v540, %v542
    %v544 = vrot.slane %v537, %v543
    %v545 = vcombine.high %v544, 0
    %v546 = vcombine.low %v459, %v466
    %v548 = vunpack.c.l.s4 1983009808
    %v549 = vunpack.c.0.s8 %v548
    %v550 = vlaneseq
    %v551 = vshrl.u32 %v550, 7
    %v552 = vsub.s32 %v549, %v551
    %v553 = vrot.slane %v546, %v552
    %v554 = vcombine.low %v469, %v470
    %v556 = vunpack.c.l.s4 1983009808
    %v557 = vunpack.c.0.s8 %v556
    %v558 = vlaneseq
    %v559 = vshrl.u32 %v558, 7
    %v560 = vsub.s32 %v557, %v559
    %v561 = vrot.slane %v554, %v560
    %v562 = vcombine.low %v553, %v561
    %v564 = vunpack.c.l.s4 1934713408
    %v565 = vunpack.c.0.s8 %v564
    %v566 = vlaneseq
    %v567 = vshrl.u32 %v566, 7
    %v568 = vsub.s32 %v565, %v567
    %v569 = vrot.slane %v562, %v568
    %v570 = vcombine.high %v569, 0
    %v573 = vpack.i.b16 %v519, %v494
    %v574 = vshrl.u32 %v494, 16
    %v575 = vshrl.u32 %v519, 16
    %v576 = vpack.i.b16 %v575, %v574
    %v579 = vpack.i.b16 %v520, %v495
    %v580 = vshrl.u32 %v495, 16
    %v581 = vshrl.u32 %v520, 16
    %v582 = vpack.i.b16 %v581, %v580
    %v585 = vpack.i.b16 %v569, %v544
    %v586 = vshrl.u32 %v544, 16
    %v587 = vshrl.u32 %v569, 16
    %v588 = vpack.i.b16 %v587, %v586
    %v591 = vpack.i.b16 %v570, %v545
    %v592 = vshrl.u32 %v545, 16
    %v593 = vshrl.u32 %v570, 16
    %v594 = vpack.i.b16 %v593, %v592
    %596 = vrot.lane.b32.xlu0 %v308, 96
    %v597 = vpop.permute.xlu0 %596
    %598 = vrot.lane.b32.xlu0 %v308, 64
    %v599 = vpop.permute.xlu0 %598
    %600 = vrot.lane.b32.xlu0 %v308, 32
    %v601 = vpop.permute.xlu0 %600
    %v604 = vpack.i.b16 %v597, %v308
    %v606 = vshrl.u32 %v308, 16
    %v607 = vshrl.u32 %v597, 16
    %v608 = vpack.i.b16 %v607, %v606
    %v612 = vpack.i.b16 %v601, %v599
    %v614 = vshrl.u32 %v599, 16
    %v615 = vshrl.u32 %v601, 16
    %v616 = vpack.i.b16 %v615, %v614
    %v618 = vcombine.high %v604, %v334
    %v620 = vunpack.c.l.s4 1983009808
    %v621 = vunpack.c.0.s8 %v620
    %v622 = vlaneseq
    %v623 = vshrl.u32 %v622, 7
    %v624 = vsub.s32 %v621, %v623
    %v625 = vrot.slane %v604, %v624
    %v627 = vunpack.c.l.s4 1983009808
    %v628 = vunpack.c.0.s8 %v627
    %v629 = vlaneseq
    %v630 = vshrl.u32 %v629, 7
    %v631 = vsub.s32 %v628, %v630
    %v632 = vrot.slane %v618, %v631
    %v633 = vcombine.high %v612, %v334
    %v635 = vunpack.c.l.s4 1983009808
    %v636 = vunpack.c.0.s8 %v635
    %v637 = vlaneseq
    %v638 = vshrl.u32 %v637, 7
    %v639 = vsub.s32 %v636, %v638
    %v640 = vrot.slane %v612, %v639
    %v642 = vunpack.c.l.s4 1983009808
    %v643 = vunpack.c.0.s8 %v642
    %v644 = vlaneseq
    %v645 = vshrl.u32 %v644, 7
    %v646 = vsub.s32 %v643, %v645
    %v647 = vrot.slane %v633, %v646
    %v648 = vcombine.low %v625, %v640
    %v649 = vcombine.high %v625, %v640
    %v651 = vunpack.c.l.s4 1934713408
    %v652 = vunpack.c.0.s8 %v651
    %v653 = vlaneseq
    %v654 = vshrl.u32 %v653, 7
    %v655 = vsub.s32 %v652, %v654
    %v656 = vrot.slane %v648, %v655
    %v658 = vunpack.c.l.s4 1934713408
    %v659 = vunpack.c.0.s8 %v658
    %v660 = vlaneseq
    %v661 = vshrl.u32 %v660, 7
    %v662 = vsub.s32 %v659, %v661
    %v663 = vrot.slane %v649, %v662
    %v664 = vcombine.low %v632, %v647
    %v665 = vcombine.high %v632, %v647
    %v667 = vunpack.c.l.s4 1934713408
    %v668 = vunpack.c.0.s8 %v667
    %v669 = vlaneseq
    %v670 = vshrl.u32 %v669, 7
    %v671 = vsub.s32 %v668, %v670
    %v672 = vrot.slane %v664, %v671
    %v674 = vunpack.c.l.s4 1934713408
    %v675 = vunpack.c.0.s8 %v674
    %v676 = vlaneseq
    %v677 = vshrl.u32 %v676, 7
    %v678 = vsub.s32 %v675, %v677
    %v679 = vrot.slane %v665, %v678
    %v680 = vcombine.high %v656, 0
    %v681 = vcombine.high %v663, 0
    %v682 = vcombine.high %v672, 0
    %v683 = vcombine.high %v679, 0
    %v684 = vcombine.high %v608, %v337
    %v686 = vunpack.c.l.s4 1983009808
    %v687 = vunpack.c.0.s8 %v686
    %v688 = vlaneseq
    %v689 = vshrl.u32 %v688, 7
    %v690 = vsub.s32 %v687, %v689
    %v691 = vrot.slane %v608, %v690
    %v693 = vunpack.c.l.s4 1983009808
    %v694 = vunpack.c.0.s8 %v693
    %v695 = vlaneseq
    %v696 = vshrl.u32 %v695, 7
    %v697 = vsub.s32 %v694, %v696
    %v698 = vrot.slane %v684, %v697
    %v699 = vcombine.high %v616, %v337
    %v701 = vunpack.c.l.s4 1983009808
    %v702 = vunpack.c.0.s8 %v701
    %v703 = vlaneseq
    %v704 = vshrl.u32 %v703, 7
    %v705 = vsub.s32 %v702, %v704
    %v706 = vrot.slane %v616, %v705
    %v708 = vunpack.c.l.s4 1983009808
    %v709 = vunpack.c.0.s8 %v708
    %v710 = vlaneseq
    %v711 = vshrl.u32 %v710, 7
    %v712 = vsub.s32 %v709, %v711
    %v713 = vrot.slane %v699, %v712
    %v714 = vcombine.low %v691, %v706
    %v715 = vcombine.high %v691, %v706
    %v717 = vunpack.c.l.s4 1934713408
    %v718 = vunpack.c.0.s8 %v717
    %v719 = vlaneseq
    %v720 = vshrl.u32 %v719, 7
    %v721 = vsub.s32 %v718, %v720
    %v722 = vrot.slane %v714, %v721
    %v724 = vunpack.c.l.s4 1934713408
    %v725 = vunpack.c.0.s8 %v724
    %v726 = vlaneseq
    %v727 = vshrl.u32 %v726, 7
    %v728 = vsub.s32 %v725, %v727
    %v729 = vrot.slane %v715, %v728
    %v730 = vcombine.low %v698, %v713
    %v731 = vcombine.high %v698, %v713
    %v733 = vunpack.c.l.s4 1934713408
    %v734 = vunpack.c.0.s8 %v733
    %v735 = vlaneseq
    %v736 = vshrl.u32 %v735, 7
    %v737 = vsub.s32 %v734, %v736
    %v738 = vrot.slane %v730, %v737
    %v740 = vunpack.c.l.s4 1934713408
    %v741 = vunpack.c.0.s8 %v740
    %v742 = vlaneseq
    %v743 = vshrl.u32 %v742, 7
    %v744 = vsub.s32 %v741, %v743
    %v745 = vrot.slane %v731, %v744
    %v746 = vcombine.high %v722, 0
    %v747 = vcombine.high %v729, 0
    %v748 = vcombine.high %v738, 0
    %v749 = vcombine.high %v745, 0
    %v750 = vcombine.low %v656, %v663
    %v752 = vunpack.c.l.s4 1983009808
    %v753 = vunpack.c.0.s8 %v752
    %v754 = vlaneseq
    %v755 = vshrl.u32 %v754, 7
    %v756 = vsub.s32 %v753, %v755
    %v757 = vrot.slane %v750, %v756
    %v758 = vcombine.low %v680, %v681
    %v760 = vunpack.c.l.s4 1983009808
    %v761 = vunpack.c.0.s8 %v760
    %v762 = vlaneseq
    %v763 = vshrl.u32 %v762, 7
    %v764 = vsub.s32 %v761, %v763
    %v765 = vrot.slane %v758, %v764
    %v766 = vcombine.low %v757, %v765
    %v768 = vunpack.c.l.s4 1934713408
    %v769 = vunpack.c.0.s8 %v768
    %v770 = vlaneseq
    %v771 = vshrl.u32 %v770, 7
    %v772 = vsub.s32 %v769, %v771
    %v773 = vrot.slane %v766, %v772
    %v774 = vcombine.high %v773, 0
    %v775 = vcombine.low %v722, %v729
    %v777 = vunpack.c.l.s4 1983009808
    %v778 = vunpack.c.0.s8 %v777
    %v779 = vlaneseq
    %v780 = vshrl.u32 %v779, 7
    %v781 = vsub.s32 %v778, %v780
    %v782 = vrot.slane %v775, %v781
    %v783 = vcombine.low %v746, %v747
    %v785 = vunpack.c.l.s4 1983009808
    %v786 = vunpack.c.0.s8 %v785
    %v787 = vlaneseq
    %v788 = vshrl.u32 %v787, 7
    %v789 = vsub.s32 %v786, %v788
    %v790 = vrot.slane %v783, %v789
    %v791 = vcombine.low %v782, %v790
    %v793 = vunpack.c.l.s4 1934713408
    %v794 = vunpack.c.0.s8 %v793
    %v795 = vlaneseq
    %v796 = vshrl.u32 %v795, 7
    %v797 = vsub.s32 %v794, %v796
    %v798 = vrot.slane %v791, %v797
    %v799 = vcombine.high %v798, 0
    %v800 = vcombine.low %v672, %v679
    %v802 = vunpack.c.l.s4 1983009808
    %v803 = vunpack.c.0.s8 %v802
    %v804 = vlaneseq
    %v805 = vshrl.u32 %v804, 7
    %v806 = vsub.s32 %v803, %v805
    %v807 = vrot.slane %v800, %v806
    %v808 = vcombine.low %v682, %v683
    %v810 = vunpack.c.l.s4 1983009808
    %v811 = vunpack.c.0.s8 %v810
    %v812 = vlaneseq
    %v813 = vshrl.u32 %v812, 7
    %v814 = vsub.s32 %v811, %v813
    %v815 = vrot.slane %v808, %v814
    %v816 = vcombine.low %v807, %v815
    %v818 = vunpack.c.l.s4 1934713408
    %v819 = vunpack.c.0.s8 %v818
    %v820 = vlaneseq
    %v821 = vshrl.u32 %v820, 7
    %v822 = vsub.s32 %v819, %v821
    %v823 = vrot.slane %v816, %v822
    %v824 = vcombine.high %v823, 0
    %v825 = vcombine.low %v738, %v745
    %v827 = vunpack.c.l.s4 1983009808
    %v828 = vunpack.c.0.s8 %v827
    %v829 = vlaneseq
    %v830 = vshrl.u32 %v829, 7
    %v831 = vsub.s32 %v828, %v830
    %v832 = vrot.slane %v825, %v831
    %v833 = vcombine.low %v748, %v749
    %v835 = vunpack.c.l.s4 1983009808
    %v836 = vunpack.c.0.s8 %v835
    %v837 = vlaneseq
    %v838 = vshrl.u32 %v837, 7
    %v839 = vsub.s32 %v836, %v838
    %v840 = vrot.slane %v833, %v839
    %v841 = vcombine.low %v832, %v840
    %v843 = vunpack.c.l.s4 1934713408
    %v844 = vunpack.c.0.s8 %v843
    %v845 = vlaneseq
    %v846 = vshrl.u32 %v845, 7
    %v847 = vsub.s32 %v844, %v846
    %v848 = vrot.slane %v841, %v847
    %v849 = vcombine.high %v848, 0
    %v852 = vpack.i.b16 %v798, %v773
    %v853 = vshrl.u32 %v773, 16
    %v854 = vshrl.u32 %v798, 16
    %v855 = vpack.i.b16 %v854, %v853
    %v858 = vpack.i.b16 %v799, %v774
    %v859 = vshrl.u32 %v774, 16
    %v860 = vshrl.u32 %v799, 16
    %v861 = vpack.i.b16 %v860, %v859
    %v864 = vpack.i.b16 %v848, %v823
    %v865 = vshrl.u32 %v823, 16
    %v866 = vshrl.u32 %v848, 16
    %v867 = vpack.i.b16 %v866, %v865
    %v870 = vpack.i.b16 %v849, %v824
    %v871 = vshrl.u32 %v824, 16
    %v872 = vshrl.u32 %v849, 16
    %v873 = vpack.i.b16 %v872, %v871
    %875 = vrot.lane.b32.xlu0 %v309, 96
    %v876 = vpop.permute.xlu0 %875
    %877 = vrot.lane.b32.xlu0 %v309, 64
    %v878 = vpop.permute.xlu0 %877
    %879 = vrot.lane.b32.xlu0 %v309, 32
    %v880 = vpop.permute.xlu0 %879
    %v883 = vpack.i.b16 %v876, %v309
    %v885 = vshrl.u32 %v309, 16
    %v886 = vshrl.u32 %v876, 16
    %v887 = vpack.i.b16 %v886, %v885
    %v891 = vpack.i.b16 %v880, %v878
    %v893 = vshrl.u32 %v878, 16
    %v894 = vshrl.u32 %v880, 16
    %v895 = vpack.i.b16 %v894, %v893
    %v897 = vcombine.high %v883, %v334
    %v899 = vunpack.c.l.s4 1983009808
    %v900 = vunpack.c.0.s8 %v899
    %v901 = vlaneseq
    %v902 = vshrl.u32 %v901, 7
    %v903 = vsub.s32 %v900, %v902
    %v904 = vrot.slane %v883, %v903
    %v906 = vunpack.c.l.s4 1983009808
    %v907 = vunpack.c.0.s8 %v906
    %v908 = vlaneseq
    %v909 = vshrl.u32 %v908, 7
    %v910 = vsub.s32 %v907, %v909
    %v911 = vrot.slane %v897, %v910
    %v912 = vcombine.high %v891, %v334
    %v914 = vunpack.c.l.s4 1983009808
    %v915 = vunpack.c.0.s8 %v914
    %v916 = vlaneseq
    %v917 = vshrl.u32 %v916, 7
    %v918 = vsub.s32 %v915, %v917
    %v919 = vrot.slane %v891, %v918
    %v921 = vunpack.c.l.s4 1983009808
    %v922 = vunpack.c.0.s8 %v921
    %v923 = vlaneseq
    %v924 = vshrl.u32 %v923, 7
    %v925 = vsub.s32 %v922, %v924
    %v926 = vrot.slane %v912, %v925
    %v927 = vcombine.low %v904, %v919
    %v928 = vcombine.high %v904, %v919
    %v930 = vunpack.c.l.s4 1934713408
    %v931 = vunpack.c.0.s8 %v930
    %v932 = vlaneseq
    %v933 = vshrl.u32 %v932, 7
    %v934 = vsub.s32 %v931, %v933
    %v935 = vrot.slane %v927, %v934
    %v937 = vunpack.c.l.s4 1934713408
    %v938 = vunpack.c.0.s8 %v937
    %v939 = vlaneseq
    %v940 = vshrl.u32 %v939, 7
    %v941 = vsub.s32 %v938, %v940
    %v942 = vrot.slane %v928, %v941
    %v943 = vcombine.low %v911, %v926
    %v944 = vcombine.high %v911, %v926
    %v946 = vunpack.c.l.s4 1934713408
    %v947 = vunpack.c.0.s8 %v946
    %v948 = vlaneseq
    %v949 = vshrl.u32 %v948, 7
    %v950 = vsub.s32 %v947, %v949
    %v951 = vrot.slane %v943, %v950
    %v953 = vunpack.c.l.s4 1934713408
    %v954 = vunpack.c.0.s8 %v953
    %v955 = vlaneseq
    %v956 = vshrl.u32 %v955, 7
    %v957 = vsub.s32 %v954, %v956
    %v958 = vrot.slane %v944, %v957
    %v959 = vcombine.high %v935, 0
    %v960 = vcombine.high %v942, 0
    %v961 = vcombine.high %v951, 0
    %v962 = vcombine.high %v958, 0
    %v963 = vcombine.high %v887, %v337
    %v965 = vunpack.c.l.s4 1983009808
    %v966 = vunpack.c.0.s8 %v965
    %v967 = vlaneseq
    %v968 = vshrl.u32 %v967, 7
    %v969 = vsub.s32 %v966, %v968
    %v970 = vrot.slane %v887, %v969
    %v972 = vunpack.c.l.s4 1983009808
    %v973 = vunpack.c.0.s8 %v972
    %v974 = vlaneseq
    %v975 = vshrl.u32 %v974, 7
    %v976 = vsub.s32 %v973, %v975
    %v977 = vrot.slane %v963, %v976
    %v978 = vcombine.high %v895, %v337
    %v980 = vunpack.c.l.s4 1983009808
    %v981 = vunpack.c.0.s8 %v980
    %v982 = vlaneseq
    %v983 = vshrl.u32 %v982, 7
    %v984 = vsub.s32 %v981, %v983
    %v985 = vrot.slane %v895, %v984
    %v987 = vunpack.c.l.s4 1983009808
    %v988 = vunpack.c.0.s8 %v987
    %v989 = vlaneseq
    %v990 = vshrl.u32 %v989, 7
    %v991 = vsub.s32 %v988, %v990
    %v992 = vrot.slane %v978, %v991
    %v993 = vcombine.low %v970, %v985
    %v994 = vcombine.high %v970, %v985
    %v996 = vunpack.c.l.s4 1934713408
    %v997 = vunpack.c.0.s8 %v996
    %v998 = vlaneseq
    %v999 = vshrl.u32 %v998, 7
    %v1000 = vsub.s32 %v997, %v999
    %v1001 = vrot.slane %v993, %v1000
    %v1003 = vunpack.c.l.s4 1934713408
    %v1004 = vunpack.c.0.s8 %v1003
    %v1005 = vlaneseq
    %v1006 = vshrl.u32 %v1005, 7
    %v1007 = vsub.s32 %v1004, %v1006
    %v1008 = vrot.slane %v994, %v1007
    %v1009 = vcombine.low %v977, %v992
    %v1010 = vcombine.high %v977, %v992
    %v1012 = vunpack.c.l.s4 1934713408
    %v1013 = vunpack.c.0.s8 %v1012
    %v1014 = vlaneseq
    %v1015 = vshrl.u32 %v1014, 7
    %v1016 = vsub.s32 %v1013, %v1015
    %v1017 = vrot.slane %v1009, %v1016
    %v1019 = vunpack.c.l.s4 1934713408
    %v1020 = vunpack.c.0.s8 %v1019
    %v1021 = vlaneseq
    %v1022 = vshrl.u32 %v1021, 7
    %v1023 = vsub.s32 %v1020, %v1022
    %v1024 = vrot.slane %v1010, %v1023
    %v1025 = vcombine.high %v1001, 0
    %v1026 = vcombine.high %v1008, 0
    %v1027 = vcombine.high %v1017, 0
    %v1028 = vcombine.high %v1024, 0
    %v1029 = vcombine.low %v935, %v942
    %v1031 = vunpack.c.l.s4 1983009808
    %v1032 = vunpack.c.0.s8 %v1031
    %v1033 = vlaneseq
    %v1034 = vshrl.u32 %v1033, 7
    %v1035 = vsub.s32 %v1032, %v1034
    %v1036 = vrot.slane %v1029, %v1035
    %v1037 = vcombine.low %v959, %v960
    %v1039 = vunpack.c.l.s4 1983009808
    %v1040 = vunpack.c.0.s8 %v1039
    %v1041 = vlaneseq
    %v1042 = vshrl.u32 %v1041, 7
    %v1043 = vsub.s32 %v1040, %v1042
    %v1044 = vrot.slane %v1037, %v1043
    %v1045 = vcombine.low %v1036, %v1044
    %v1047 = vunpack.c.l.s4 1934713408
    %v1048 = vunpack.c.0.s8 %v1047
    %v1049 = vlaneseq
    %v1050 = vshrl.u32 %v1049, 7
    %v1051 = vsub.s32 %v1048, %v1050
    %v1052 = vrot.slane %v1045, %v1051
    %v1053 = vcombine.high %v1052, 0
    %v1054 = vcombine.low %v1001, %v1008
    %v1056 = vunpack.c.l.s4 1983009808
    %v1057 = vunpack.c.0.s8 %v1056
    %v1058 = vlaneseq
    %v1059 = vshrl.u32 %v1058, 7
    %v1060 = vsub.s32 %v1057, %v1059
    %v1061 = vrot.slane %v1054, %v1060
    %v1062 = vcombine.low %v1025, %v1026
    %v1064 = vunpack.c.l.s4 1983009808
    %v1065 = vunpack.c.0.s8 %v1064
    %v1066 = vlaneseq
    %v1067 = vshrl.u32 %v1066, 7
    %v1068 = vsub.s32 %v1065, %v1067
    %v1069 = vrot.slane %v1062, %v1068
    %v1070 = vcombine.low %v1061, %v1069
    %v1072 = vunpack.c.l.s4 1934713408
    %v1073 = vunpack.c.0.s8 %v1072
    %v1074 = vlaneseq
    %v1075 = vshrl.u32 %v1074, 7
    %v1076 = vsub.s32 %v1073, %v1075
    %v1077 = vrot.slane %v1070, %v1076
    %v1078 = vcombine.high %v1077, 0
    %v1079 = vcombine.low %v951, %v958
    %v1081 = vunpack.c.l.s4 1983009808
    %v1082 = vunpack.c.0.s8 %v1081
    %v1083 = vlaneseq
    %v1084 = vshrl.u32 %v1083, 7
    %v1085 = vsub.s32 %v1082, %v1084
    %v1086 = vrot.slane %v1079, %v1085
    %v1087 = vcombine.low %v961, %v962
    %v1089 = vunpack.c.l.s4 1983009808
    %v1090 = vunpack.c.0.s8 %v1089
    %v1091 = vlaneseq
    %v1092 = vshrl.u32 %v1091, 7
    %v1093 = vsub.s32 %v1090, %v1092
    %v1094 = vrot.slane %v1087, %v1093
    %v1095 = vcombine.low %v1086, %v1094
    %v1097 = vunpack.c.l.s4 1934713408
    %v1098 = vunpack.c.0.s8 %v1097
    %v1099 = vlaneseq
    %v1100 = vshrl.u32 %v1099, 7
    %v1101 = vsub.s32 %v1098, %v1100
    %v1102 = vrot.slane %v1095, %v1101
    %v1103 = vcombine.high %v1102, 0
    %v1104 = vcombine.low %v1017, %v1024
    %v1106 = vunpack.c.l.s4 1983009808
    %v1107 = vunpack.c.0.s8 %v1106
    %v1108 = vlaneseq
    %v1109 = vshrl.u32 %v1108, 7
    %v1110 = vsub.s32 %v1107, %v1109
    %v1111 = vrot.slane %v1104, %v1110
    %v1112 = vcombine.low %v1027, %v1028
    %v1114 = vunpack.c.l.s4 1983009808
    %v1115 = vunpack.c.0.s8 %v1114
    %v1116 = vlaneseq
    %v1117 = vshrl.u32 %v1116, 7
    %v1118 = vsub.s32 %v1115, %v1117
    %v1119 = vrot.slane %v1112, %v1118
    %v1120 = vcombine.low %v1111, %v1119
    %v1122 = vunpack.c.l.s4 1934713408
    %v1123 = vunpack.c.0.s8 %v1122
    %v1124 = vlaneseq
    %v1125 = vshrl.u32 %v1124, 7
    %v1126 = vsub.s32 %v1123, %v1125
    %v1127 = vrot.slane %v1120, %v1126
    %v1128 = vcombine.high %v1127, 0
    %v1131 = vpack.i.b16 %v1077, %v1052
    %v1132 = vshrl.u32 %v1052, 16
    %v1133 = vshrl.u32 %v1077, 16
    %v1134 = vpack.i.b16 %v1133, %v1132
    %v1137 = vpack.i.b16 %v1078, %v1053
    %v1138 = vshrl.u32 %v1053, 16
    %v1139 = vshrl.u32 %v1078, 16
    %v1140 = vpack.i.b16 %v1139, %v1138
    %v1143 = vpack.i.b16 %v1127, %v1102
    %v1144 = vshrl.u32 %v1102, 16
    %v1145 = vshrl.u32 %v1127, 16
    %v1146 = vpack.i.b16 %v1145, %v1144
    %v1149 = vpack.i.b16 %v1128, %v1103
    %v1150 = vshrl.u32 %v1103, 16
    %v1151 = vshrl.u32 %v1128, 16
    %v1152 = vpack.i.b16 %v1151, %v1150
    %vm1153 = vcmask 261120
    %v1155 = vsel %vm1153, %v573, 0
    %v1158 = vsel %vm1153, %v852, 0
    %1160 = vmatprep.subr.bf16.mxu0 0
    %1161 = vmatpush1.bf16.xpose.msra.mxu0 %v1158
    %1162 = vmatprep.subr.bf16.mxu0 0
    %1163 = vmatpush1.bf16.xpose.msra.mxu0 0
    %1164 = vmatprep.subr.bf16.mxu0 0
    %1165 = vmatpush1.bf16.xpose.msra.mxu0 0
    %1166 = vmatprep.subr.bf16.mxu0 0
    %1167 = vmatpush1.bf16.xpose.msra.mxu0 0
    %1168 = vmatprep.subr.bf16.mxu0 0
    %1169 = vmatpush1.bf16.xpose.msra.mxu0 0
    %1170 = vmatprep.subr.bf16.mxu0 0
    %1171 = vmatpush1.bf16.xpose.msra.mxu0 0
    %1172 = vmatprep.subr.bf16.mxu0 0
    %1173 = vmatpush1.bf16.xpose.msra.mxu0 0
    %1174 = vmatprep.subr.bf16.mxu0 0
    %1175 = vmatpush1.bf16.xpose.msra.mxu0 0
    %1176 = vmatprep.subr.bf16.mxu0 0
    %1177 = vmatpush1.bf16.xpose.msra.mxu0 0
    %1178 = vmatprep.subr.bf16.mxu0 0
    %1179 = vmatpush1.bf16.xpose.msra.mxu0 0
    %1180 = vmatprep.subr.bf16.mxu0 0
    %1181 = vmatpush1.bf16.xpose.msra.mxu0 0
    %1182 = vmatprep.subr.bf16.mxu0 0
    %1183 = vmatpush1.bf16.xpose.msra.mxu0 0
    %1184 = vmatprep.subr.bf16.mxu0 0
    %1185 = vmatpush1.bf16.xpose.msra.mxu0 0
    %1186 = vmatprep.subr.bf16.mxu0 0
    %1187 = vmatpush1.bf16.xpose.msra.mxu0 0
    %1188 = vmatprep.subr.bf16.mxu0 0
    %1189 = vmatpush1.bf16.xpose.msra.mxu0 0
    %1190 = vmatprep.subr.bf16.mxu0 0
    %1191 = vmatpush1.bf16.xpose.msra.mxu0 0
    %1192 = vmatprep.mubr.bf16.mxu0 0
    %1193 = vmatmul.mubr.bf16.gmra.mrb[0].mxu0 %v1155
    %v1194 = vpop.f32.mrb[0].mxu0
    %v1195 = vadd.f32 0.0, %v1194
    %v1196 = vpop.f32.mrb[0].mxu0
    %v1197 = vpop.f32.mrb[0].mxu0
    %v1198 = vpop.f32.mrb[0].mxu0
    %1199 = vdwg.mxu0
    %v1201 = vsel %vm1153, %v576, 0
    %v1204 = vsel %vm1153, %v855, 0
    %1206 = vmatprep.subr.bf16.mxu0 0
    %1207 = vmatpush1.bf16.xpose.msra.mxu0 %v1204
    %1208 = vmatprep.subr.bf16.mxu0 0
    %1209 = vmatpush1.bf16.xpose.msra.mxu0 0
    %1210 = vmatprep.subr.bf16.mxu0 0
    %1211 = vmatpush1.bf16.xpose.msra.mxu0 0
    %1212 = vmatprep.subr.bf16.mxu0 0
    %1213 = vmatpush1.bf16.xpose.msra.mxu0 0
    %1214 = vmatprep.subr.bf16.mxu0 0
    %1215 = vmatpush1.bf16.xpose.msra.mxu0 0
    %1216 = vmatprep.subr.bf16.mxu0 0
    %1217 = vmatpush1.bf16.xpose.msra.mxu0 0
    %1218 = vmatprep.subr.bf16.mxu0 0
    %1219 = vmatpush1.bf16.xpose.msra.mxu0 0
    %1220 = vmatprep.subr.bf16.mxu0 0
    %1221 = vmatpush1.bf16.xpose.msra.mxu0 0
    %1222 = vmatprep.subr.bf16.mxu0 0
    %1223 = vmatpush1.bf16.xpose.msra.mxu0 0
    %1224 = vmatprep.subr.bf16.mxu0 0
    %1225 = vmatpush1.bf16.xpose.msra.mxu0 0
    %1226 = vmatprep.subr.bf16.mxu0 0
    %1227 = vmatpush1.bf16.xpose.msra.mxu0 0
    %1228 = vmatprep.subr.bf16.mxu0 0
    %1229 = vmatpush1.bf16.xpose.msra.mxu0 0
    %1230 = vmatprep.subr.bf16.mxu0 0
    %1231 = vmatpush1.bf16.xpose.msra.mxu0 0
    %1232 = vmatprep.subr.bf16.mxu0 0
    %1233 = vmatpush1.bf16.xpose.msra.mxu0 0
    %1234 = vmatprep.subr.bf16.mxu0 0
    %1235 = vmatpush1.bf16.xpose.msra.mxu0 0
    %1236 = vmatprep.subr.bf16.mxu0 0
    %1237 = vmatpush1.bf16.xpose.msra.mxu0 0
    %1238 = vmatprep.mubr.bf16.mxu0 0
    %1239 = vmatmul.mubr.bf16.gmra.mrb[0].mxu0 %v1201
    %v1240 = vpop.f32.mrb[0].mxu0
    %v1241 = vadd.f32 0.0, %v1240
    %v1242 = vpop.f32.mrb[0].mxu0
    %v1243 = vpop.f32.mrb[0].mxu0
    %v1244 = vpop.f32.mrb[0].mxu0
    %1245 = vdwg.mxu0
    %v1247 = vsel %vm1153, %v579, 0
    %v1250 = vsel %vm1153, %v858, 0
    %1252 = vmatprep.subr.bf16.mxu0 0
    %1253 = vmatpush1.bf16.xpose.msra.mxu0 %v1250
    %1254 = vmatprep.subr.bf16.mxu0 0
    %1255 = vmatpush1.bf16.xpose.msra.mxu0 0
    %1256 = vmatprep.subr.bf16.mxu0 0
    %1257 = vmatpush1.bf16.xpose.msra.mxu0 0
    %1258 = vmatprep.subr.bf16.mxu0 0
    %1259 = vmatpush1.bf16.xpose.msra.mxu0 0
    %1260 = vmatprep.subr.bf16.mxu0 0
    %1261 = vmatpush1.bf16.xpose.msra.mxu0 0
    %1262 = vmatprep.subr.bf16.mxu0 0
    %1263 = vmatpush1.bf16.xpose.msra.mxu0 0
    %1264 = vmatprep.subr.bf16.mxu0 0
    %1265 = vmatpush1.bf16.xpose.msra.mxu0 0
    %1266 = vmatprep.subr.bf16.mxu0 0
    %1267 = vmatpush1.bf16.xpose.msra.mxu0 0
    %1268 = vmatprep.subr.bf16.mxu0 0
    %1269 = vmatpush1.bf16.xpose.msra.mxu0 0
    %1270 = vmatprep.subr.bf16.mxu0 0
    %1271 = vmatpush1.bf16.xpose.msra.mxu0 0
    %1272 = vmatprep.subr.bf16.mxu0 0
    %1273 = vmatpush1.bf16.xpose.msra.mxu0 0
    %1274 = vmatprep.subr.bf16.mxu0 0
    %1275 = vmatpush1.bf16.xpose.msra.mxu0 0
    %1276 = vmatprep.subr.bf16.mxu0 0
    %1277 = vmatpush1.bf16.xpose.msra.mxu0 0
    %1278 = vmatprep.subr.bf16.mxu0 0
    %1279 = vmatpush1.bf16.xpose.msra.mxu0 0
    %1280 = vmatprep.subr.bf16.mxu0 0
    %1281 = vmatpush1.bf16.xpose.msra.mxu0 0
    %1282 = vmatprep.subr.bf16.mxu0 0
    %1283 = vmatpush1.bf16.xpose.msra.mxu0 0
    %1284 = vmatprep.mubr.bf16.mxu0 0
    %1285 = vmatmul.mubr.bf16.gmra.mrb[0].mxu0 %v1247
    %v1286 = vpop.f32.mrb[0].mxu0
    %v1287 = vadd.f32 0.0, %v1286
    %v1288 = vpop.f32.mrb[0].mxu0
    %v1289 = vpop.f32.mrb[0].mxu0
    %v1290 = vpop.f32.mrb[0].mxu0
    %1291 = vdwg.mxu0
    %v1293 = vsel %vm1153, %v582, 0
    %v1296 = vsel %vm1153, %v861, 0
    %1298 = vmatprep.subr.bf16.mxu0 0
    %1299 = vmatpush1.bf16.xpose.msra.mxu0 %v1296
    %1300 = vmatprep.subr.bf16.mxu0 0
    %1301 = vmatpush1.bf16.xpose.msra.mxu0 0
    %1302 = vmatprep.subr.bf16.mxu0 0
    %1303 = vmatpush1.bf16.xpose.msra.mxu0 0
    %1304 = vmatprep.subr.bf16.mxu0 0
    %1305 = vmatpush1.bf16.xpose.msra.mxu0 0
    %1306 = vmatprep.subr.bf16.mxu0 0
    %1307 = vmatpush1.bf16.xpose.msra.mxu0 0
    %1308 = vmatprep.subr.bf16.mxu0 0
    %1309 = vmatpush1.bf16.xpose.msra.mxu0 0
    %1310 = vmatprep.subr.bf16.mxu0 0
    %1311 = vmatpush1.bf16.xpose.msra.mxu0 0
    %1312 = vmatprep.subr.bf16.mxu0 0
    %1313 = vmatpush1.bf16.xpose.msra.mxu0 0
    %1314 = vmatprep.subr.bf16.mxu0 0
    %1315 = vmatpush1.bf16.xpose.msra.mxu0 0
    %1316 = vmatprep.subr.bf16.mxu0 0
    %1317 = vmatpush1.bf16.xpose.msra.mxu0 0
    %1318 = vmatprep.subr.bf16.mxu0 0
    %1319 = vmatpush1.bf16.xpose.msra.mxu0 0
    %1320 = vmatprep.subr.bf16.mxu0 0
    %1321 = vmatpush1.bf16.xpose.msra.mxu0 0
    %1322 = vmatprep.subr.bf16.mxu0 0
    %1323 = vmatpush1.bf16.xpose.msra.mxu0 0
    %1324 = vmatprep.subr.bf16.mxu0 0
    %1325 = vmatpush1.bf16.xpose.msra.mxu0 0
    %1326 = vmatprep.subr.bf16.mxu0 0
    %1327 = vmatpush1.bf16.xpose.msra.mxu0 0
    %1328 = vmatprep.subr.bf16.mxu0 0
    %1329 = vmatpush1.bf16.xpose.msra.mxu0 0
    %1330 = vmatprep.mubr.bf16.mxu0 0
    %1331 = vmatmul.mubr.bf16.gmra.mrb[0].mxu0 %v1293
    %v1332 = vpop.f32.mrb[0].mxu0
    %v1333 = vadd.f32 0.0, %v1332
    %v1334 = vpop.f32.mrb[0].mxu0
    %v1335 = vpop.f32.mrb[0].mxu0
    %v1336 = vpop.f32.mrb[0].mxu0
    %1337 = vdwg.mxu0
    %v1339 = vsel %vm1153, %v585, 0
    %v1342 = vsel %vm1153, %v864, 0
    %1344 = vmatprep.subr.bf16.mxu0 0
    %1345 = vmatpush1.bf16.xpose.msra.mxu0 %v1342
    %1346 = vmatprep.subr.bf16.mxu0 0
    %1347 = vmatpush1.bf16.xpose.msra.mxu0 0
    %1348 = vmatprep.subr.bf16.mxu0 0
    %1349 = vmatpush1.bf16.xpose.msra.mxu0 0
    %1350 = vmatprep.subr.bf16.mxu0 0
    %1351 = vmatpush1.bf16.xpose.msra.mxu0 0
    %1352 = vmatprep.subr.bf16.mxu0 0
    %1353 = vmatpush1.bf16.xpose.msra.mxu0 0
    %1354 = vmatprep.subr.bf16.mxu0 0
    %1355 = vmatpush1.bf16.xpose.msra.mxu0 0
    %1356 = vmatprep.subr.bf16.mxu0 0
    %1357 = vmatpush1.bf16.xpose.msra.mxu0 0
    %1358 = vmatprep.subr.bf16.mxu0 0
    %1359 = vmatpush1.bf16.xpose.msra.mxu0 0
    %1360 = vmatprep.subr.bf16.mxu0 0
    %1361 = vmatpush1.bf16.xpose.msra.mxu0 0
    %1362 = vmatprep.subr.bf16.mxu0 0
    %1363 = vmatpush1.bf16.xpose.msra.mxu0 0
    %1364 = vmatprep.subr.bf16.mxu0 0
    %1365 = vmatpush1.bf16.xpose.msra.mxu0 0
    %1366 = vmatprep.subr.bf16.mxu0 0
    %1367 = vmatpush1.bf16.xpose.msra.mxu0 0
    %1368 = vmatprep.subr.bf16.mxu0 0
    %1369 = vmatpush1.bf16.xpose.msra.mxu0 0
    %1370 = vmatprep.subr.bf16.mxu0 0
    %1371 = vmatpush1.bf16.xpose.msra.mxu0 0
    %1372 = vmatprep.subr.bf16.mxu0 0
    %1373 = vmatpush1.bf16.xpose.msra.mxu0 0
    %1374 = vmatprep.subr.bf16.mxu0 0
    %1375 = vmatpush1.bf16.xpose.msra.mxu0 0
    %1376 = vmatprep.mubr.bf16.mxu0 0
    %1377 = vmatmul.mubr.bf16.gmra.mrb[0].mxu0 %v1339
    %v1378 = vpop.f32.mrb[0].mxu0
    %v1379 = vadd.f32 0.0, %v1378
    %v1380 = vpop.f32.mrb[0].mxu0
    %v1381 = vpop.f32.mrb[0].mxu0
    %v1382 = vpop.f32.mrb[0].mxu0
    %1383 = vdwg.mxu0
    %v1385 = vsel %vm1153, %v588, 0
    %v1388 = vsel %vm1153, %v867, 0
    %1390 = vmatprep.subr.bf16.mxu0 0
    %1391 = vmatpush1.bf16.xpose.msra.mxu0 %v1388
    %1392 = vmatprep.subr.bf16.mxu0 0
    %1393 = vmatpush1.bf16.xpose.msra.mxu0 0
    %1394 = vmatprep.subr.bf16.mxu0 0
    %1395 = vmatpush1.bf16.xpose.msra.mxu0 0
    %1396 = vmatprep.subr.bf16.mxu0 0
    %1397 = vmatpush1.bf16.xpose.msra.mxu0 0
    %1398 = vmatprep.subr.bf16.mxu0 0
    %1399 = vmatpush1.bf16.xpose.msra.mxu0 0
    %1400 = vmatprep.subr.bf16.mxu0 0
    %1401 = vmatpush1.bf16.xpose.msra.mxu0 0
    %1402 = vmatprep.subr.bf16.mxu0 0
    %1403 = vmatpush1.bf16.xpose.msra.mxu0 0
    %1404 = vmatprep.subr.bf16.mxu0 0
    %1405 = vmatpush1.bf16.xpose.msra.mxu0 0
    %1406 = vmatprep.subr.bf16.mxu0 0
    %1407 = vmatpush1.bf16.xpose.msra.mxu0 0
    %1408 = vmatprep.subr.bf16.mxu0 0
    %1409 = vmatpush1.bf16.xpose.msra.mxu0 0
    %1410 = vmatprep.subr.bf16.mxu0 0
    %1411 = vmatpush1.bf16.xpose.msra.mxu0 0
    %1412 = vmatprep.subr.bf16.mxu0 0
    %1413 = vmatpush1.bf16.xpose.msra.mxu0 0
    %1414 = vmatprep.subr.bf16.mxu0 0
    %1415 = vmatpush1.bf16.xpose.msra.mxu0 0
    %1416 = vmatprep.subr.bf16.mxu0 0
    %1417 = vmatpush1.bf16.xpose.msra.mxu0 0
    %1418 = vmatprep.subr.bf16.mxu0 0
    %1419 = vmatpush1.bf16.xpose.msra.mxu0 0
    %1420 = vmatprep.subr.bf16.mxu0 0
    %1421 = vmatpush1.bf16.xpose.msra.mxu0 0
    %1422 = vmatprep.mubr.bf16.mxu0 0
    %1423 = vmatmul.mubr.bf16.gmra.mrb[0].mxu0 %v1385
    %v1424 = vpop.f32.mrb[0].mxu0
    %v1425 = vadd.f32 0.0, %v1424
    %v1426 = vpop.f32.mrb[0].mxu0
    %v1427 = vpop.f32.mrb[0].mxu0
    %v1428 = vpop.f32.mrb[0].mxu0
    %1429 = vdwg.mxu0
    %v1431 = vsel %vm1153, %v591, 0
    %v1434 = vsel %vm1153, %v870, 0
    %1436 = vmatprep.subr.bf16.mxu0 0
    %1437 = vmatpush1.bf16.xpose.msra.mxu0 %v1434
    %1438 = vmatprep.subr.bf16.mxu0 0
    %1439 = vmatpush1.bf16.xpose.msra.mxu0 0
    %1440 = vmatprep.subr.bf16.mxu0 0
    %1441 = vmatpush1.bf16.xpose.msra.mxu0 0
    %1442 = vmatprep.subr.bf16.mxu0 0
    %1443 = vmatpush1.bf16.xpose.msra.mxu0 0
    %1444 = vmatprep.subr.bf16.mxu0 0
    %1445 = vmatpush1.bf16.xpose.msra.mxu0 0
    %1446 = vmatprep.subr.bf16.mxu0 0
    %1447 = vmatpush1.bf16.xpose.msra.mxu0 0
    %1448 = vmatprep.subr.bf16.mxu0 0
    %1449 = vmatpush1.bf16.xpose.msra.mxu0 0
    %1450 = vmatprep.subr.bf16.mxu0 0
    %1451 = vmatpush1.bf16.xpose.msra.mxu0 0
    %1452 = vmatprep.subr.bf16.mxu0 0
    %1453 = vmatpush1.bf16.xpose.msra.mxu0 0
    %1454 = vmatprep.subr.bf16.mxu0 0
    %1455 = vmatpush1.bf16.xpose.msra.mxu0 0
    %1456 = vmatprep.subr.bf16.mxu0 0
    %1457 = vmatpush1.bf16.xpose.msra.mxu0 0
    %1458 = vmatprep.subr.bf16.mxu0 0
    %1459 = vmatpush1.bf16.xpose.msra.mxu0 0
    %1460 = vmatprep.subr.bf16.mxu0 0
    %1461 = vmatpush1.bf16.xpose.msra.mxu0 0
    %1462 = vmatprep.subr.bf16.mxu0 0
    %1463 = vmatpush1.bf16.xpose.msra.mxu0 0
    %1464 = vmatprep.subr.bf16.mxu0 0
    %1465 = vmatpush1.bf16.xpose.msra.mxu0 0
    %1466 = vmatprep.subr.bf16.mxu0 0
    %1467 = vmatpush1.bf16.xpose.msra.mxu0 0
    %1468 = vmatprep.mubr.bf16.mxu0 0
    %1469 = vmatmul.mubr.bf16.gmra.mrb[0].mxu0 %v1431
    %v1470 = vpop.f32.mrb[0].mxu0
    %v1471 = vadd.f32 0.0, %v1470
    %v1472 = vpop.f32.mrb[0].mxu0
    %v1473 = vpop.f32.mrb[0].mxu0
    %v1474 = vpop.f32.mrb[0].mxu0
    %1475 = vdwg.mxu0
    %v1477 = vsel %vm1153, %v594, 0
    %v1480 = vsel %vm1153, %v873, 0
    %1482 = vmatprep.subr.bf16.mxu0 0
    %1483 = vmatpush1.bf16.xpose.msra.mxu0 %v1480
    %1484 = vmatprep.subr.bf16.mxu0 0
    %1485 = vmatpush1.bf16.xpose.msra.mxu0 0
    %1486 = vmatprep.subr.bf16.mxu0 0
    %1487 = vmatpush1.bf16.xpose.msra.mxu0 0
    %1488 = vmatprep.subr.bf16.mxu0 0
    %1489 = vmatpush1.bf16.xpose.msra.mxu0 0
    %1490 = vmatprep.subr.bf16.mxu0 0
    %1491 = vmatpush1.bf16.xpose.msra.mxu0 0
    %1492 = vmatprep.subr.bf16.mxu0 0
    %1493 = vmatpush1.bf16.xpose.msra.mxu0 0
    %1494 = vmatprep.subr.bf16.mxu0 0
    %1495 = vmatpush1.bf16.xpose.msra.mxu0 0
    %1496 = vmatprep.subr.bf16.mxu0 0
    %1497 = vmatpush1.bf16.xpose.msra.mxu0 0
    %1498 = vmatprep.subr.bf16.mxu0 0
    %1499 = vmatpush1.bf16.xpose.msra.mxu0 0
    %1500 = vmatprep.subr.bf16.mxu0 0
    %1501 = vmatpush1.bf16.xpose.msra.mxu0 0
    %1502 = vmatprep.subr.bf16.mxu0 0
    %1503 = vmatpush1.bf16.xpose.msra.mxu0 0
    %1504 = vmatprep.subr.bf16.mxu0 0
    %1505 = vmatpush1.bf16.xpose.msra.mxu0 0
    %1506 = vmatprep.subr.bf16.mxu0 0
    %1507 = vmatpush1.bf16.xpose.msra.mxu0 0
    %1508 = vmatprep.subr.bf16.mxu0 0
    %1509 = vmatpush1.bf16.xpose.msra.mxu0 0
    %1510 = vmatprep.subr.bf16.mxu0 0
    %1511 = vmatpush1.bf16.xpose.msra.mxu0 0
    %1512 = vmatprep.subr.bf16.mxu0 0
    %1513 = vmatpush1.bf16.xpose.msra.mxu0 0
    %1514 = vmatprep.mubr.bf16.mxu0 0
    %1515 = vmatmul.mubr.bf16.gmra.mrb[0].mxu0 %v1477
    %v1516 = vpop.f32.mrb[0].mxu0
    %v1517 = vadd.f32 0.0, %v1516
    %v1518 = vpop.f32.mrb[0].mxu0
    %v1519 = vpop.f32.mrb[0].mxu0
    %v1520 = vpop.f32.mrb[0].mxu0
    %1521 = vdwg.mxu0
    %v1522 = vmul.f32 %v1195, 0.088388346
    %v1523 = vmul.f32 %v1241, 0.088388346
    %v1524 = vmul.f32 %v1287, 0.088388346
    %v1525 = vmul.f32 %v1333, 0.088388346
    %v1526 = vmul.f32 %v1379, 0.088388346
    %v1527 = vmul.f32 %v1425, 0.088388346
    %v1528 = vmul.f32 %v1471, 0.088388346
    %v1529 = vmul.f32 %v1517, 0.088388346
    %v1530 = vlaneseq
    %v1531 = vshrl.u32 %v1530, 7
    %v1532 = vlaneseq
    %v1533 = vand.u32 %v1532, 127
    %vm1534 = vcmp.ge.s32.totalorder %v1531, %v1533
    %v1535 = vsel %vm1534, 1, 0
    %vm1536 = vcmp.eq.s32.totalorder %v1535, 1
    %v1537 = vsel %vm1536, %v1522, -1e+30
    %v1538 = vsel %vm1536, %v1523, -1e+30
    %v1539 = vsel %vm1536, %v1524, -1e+30
    %v1540 = vsel %vm1536, %v1525, -1e+30
    %v1541 = vsel %vm1536, %v1526, -1e+30
    %v1542 = vsel %vm1536, %v1527, -1e+30
    %v1543 = vsel %vm1536, %v1528, -1e+30
    %v1544 = vsel %vm1536, %v1529, -1e+30
    %vm1545 = vcmask 64512
    %v1546 = vsel %vm1545, %v1537, -inf
    %1547 = vmax.xlane.f32.xlu0 %v1546
    %v1548 = vpop.xlane.xlu0 %1547
    %v1549 = vsel %vm1545, %v1538, -inf
    %1550 = vmax.xlane.f32.xlu0 %v1549
    %v1551 = vpop.xlane.xlu0 %1550
    %v1552 = vsel %vm1545, %v1539, -inf
    %1553 = vmax.xlane.f32.xlu0 %v1552
    %v1554 = vpop.xlane.xlu0 %1553
    %v1555 = vsel %vm1545, %v1540, -inf
    %1556 = vmax.xlane.f32.xlu0 %v1555
    %v1557 = vpop.xlane.xlu0 %1556
    %v1558 = vsel %vm1545, %v1541, -inf
    %1559 = vmax.xlane.f32.xlu0 %v1558
    %v1560 = vpop.xlane.xlu0 %1559
    %v1561 = vsel %vm1545, %v1542, -inf
    %1562 = vmax.xlane.f32.xlu0 %v1561
    %v1563 = vpop.xlane.xlu0 %1562
    %v1564 = vsel %vm1545, %v1543, -inf
    %1565 = vmax.xlane.f32.xlu0 %v1564
    %v1566 = vpop.xlane.xlu0 %1565
    %v1567 = vsel %vm1545, %v1544, -inf
    %1568 = vmax.xlane.f32.xlu0 %v1567
    %v1569 = vpop.xlane.xlu0 %1568
    %v1570 = vsub.f32 %v1537, %v1548
    %v1571 = vsub.f32 %v1538, %v1551
    %v1572 = vsub.f32 %v1539, %v1554
    %v1573 = vsub.f32 %v1540, %v1557
    %v1574 = vsub.f32 %v1541, %v1560
    %v1575 = vsub.f32 %v1542, %v1563
    %v1576 = vsub.f32 %v1543, %v1566
    %v1577 = vsub.f32 %v1544, %v1569
    %v1578 = vmul.f32 %v1570, 1.442695
    %v1579 = vpow.pop %v1578
    %v1580 = vmul.f32 %v1571, 1.442695
    %v1581 = vpow.pop %v1580
    %v1582 = vmul.f32 %v1572, 1.442695
    %v1583 = vpow.pop %v1582
    %v1584 = vmul.f32 %v1573, 1.442695
    %v1585 = vpow.pop %v1584
    %v1586 = vmul.f32 %v1574, 1.442695
    %v1587 = vpow.pop %v1586
    %v1588 = vmul.f32 %v1575, 1.442695
    %v1589 = vpow.pop %v1588
    %v1590 = vmul.f32 %v1576, 1.442695
    %v1591 = vpow.pop %v1590
    %v1592 = vmul.f32 %v1577, 1.442695
    %v1593 = vpow.pop %v1592
    %v1594 = vsel %vm1545, %v1579, 0.0
    %1595 = vadd.xlane.f32.xlu0 %v1594
    %v1596 = vpop.xlane.xlu0 %1595
    %v1597 = vsel %vm1545, %v1581, 0.0
    %1598 = vadd.xlane.f32.xlu0 %v1597
    %v1599 = vpop.xlane.xlu0 %1598
    %v1600 = vsel %vm1545, %v1583, 0.0
    %1601 = vadd.xlane.f32.xlu0 %v1600
    %v1602 = vpop.xlane.xlu0 %1601
    %v1603 = vsel %vm1545, %v1585, 0.0
    %1604 = vadd.xlane.f32.xlu0 %v1603
    %v1605 = vpop.xlane.xlu0 %1604
    %v1606 = vsel %vm1545, %v1587, 0.0
    %1607 = vadd.xlane.f32.xlu0 %v1606
    %v1608 = vpop.xlane.xlu0 %1607
    %v1609 = vsel %vm1545, %v1589, 0.0
    %1610 = vadd.xlane.f32.xlu0 %v1609
    %v1611 = vpop.xlane.xlu0 %1610
    %v1612 = vsel %vm1545, %v1591, 0.0
    %1613 = vadd.xlane.f32.xlu0 %v1612
    %v1614 = vpop.xlane.xlu0 %1613
    %v1615 = vsel %vm1545, %v1593, 0.0
    %1616 = vadd.xlane.f32.xlu0 %v1615
    %v1617 = vpop.xlane.xlu0 %1616
    %v1618 = vrcp.pop %v1596
    %v1619 = vrcp.pop %v1599
    %v1620 = vrcp.pop %v1602
    %v1621 = vrcp.pop %v1605
    %v1622 = vrcp.pop %v1608
    %v1623 = vrcp.pop %v1611
    %v1624 = vrcp.pop %v1614
    %v1625 = vrcp.pop %v1617
    %v1626 = vmul.f32 %v1579, %v1618
    %v1627 = vmul.f32 %v1581, %v1619
    %v1628 = vmul.f32 %v1583, %v1620
    %v1629 = vmul.f32 %v1585, %v1621
    %v1630 = vmul.f32 %v1587, %v1622
    %v1631 = vmul.f32 %v1589, %v1623
    %v1632 = vmul.f32 %v1591, %v1624
    %v1633 = vmul.f32 %v1593, %v1625
    %v1634 = vpack.c.bf16 %v1626, %v1626
    %v1635 = vpack.c.bf16 %v1627, %v1627
    %v1636 = vpack.c.bf16 %v1628, %v1628
    %v1637 = vpack.c.bf16 %v1629, %v1629
    %v1638 = vpack.c.bf16 %v1630, %v1630
    %v1639 = vpack.c.bf16 %v1631, %v1631
    %v1640 = vpack.c.bf16 %v1632, %v1632
    %v1641 = vpack.c.bf16 %v1633, %v1633
    %v1643 = vsel %vm1545, %v1634, 0
    %vm1645 = vcmask 1043456
    %v1647 = vsel %vm1645, %v1131, 0
    %1649 = vmatprep.subr.bf16.mxu0 0
    %1650 = vmatpush1.bf16.msra.mxu0 %v1647
    %1651 = vmatprep.subr.bf16.mxu0 0
    %1652 = vmatpush1.bf16.msra.mxu0 0
    %1653 = vmatprep.subr.bf16.mxu0 0
    %1654 = vmatpush1.bf16.msra.mxu0 0
    %1655 = vmatprep.subr.bf16.mxu0 0
    %1656 = vmatpush1.bf16.msra.mxu0 0
    %1657 = vmatprep.subr.bf16.mxu0 0
    %1658 = vmatpush1.bf16.msra.mxu0 0
    %1659 = vmatprep.subr.bf16.mxu0 0
    %1660 = vmatpush1.bf16.msra.mxu0 0
    %1661 = vmatprep.subr.bf16.mxu0 0
    %1662 = vmatpush1.bf16.msra.mxu0 0
    %1663 = vmatprep.subr.bf16.mxu0 0
    %1664 = vmatpush1.bf16.msra.mxu0 0
    %1665 = vmatprep.subr.bf16.mxu0 0
    %1666 = vmatpush1.bf16.msra.mxu0 0
    %1667 = vmatprep.subr.bf16.mxu0 0
    %1668 = vmatpush1.bf16.msra.mxu0 0
    %1669 = vmatprep.subr.bf16.mxu0 0
    %1670 = vmatpush1.bf16.msra.mxu0 0
    %1671 = vmatprep.subr.bf16.mxu0 0
    %1672 = vmatpush1.bf16.msra.mxu0 0
    %1673 = vmatprep.subr.bf16.mxu0 0
    %1674 = vmatpush1.bf16.msra.mxu0 0
    %1675 = vmatprep.subr.bf16.mxu0 0
    %1676 = vmatpush1.bf16.msra.mxu0 0
    %1677 = vmatprep.subr.bf16.mxu0 0
    %1678 = vmatpush1.bf16.msra.mxu0 0
    %1679 = vmatprep.subr.bf16.mxu0 0
    %1680 = vmatpush1.bf16.msra.mxu0 0
    %1681 = vmatprep.mubr.bf16.mxu0 0
    %1682 = vmatmul.mubr.bf16.gmra.mrb[0].mxu0 %v1643
    %v1683 = vpop.f32.mrb[0].mxu0
    %v1684 = vadd.f32 0.0, %v1683
    %v1685 = vpop.f32.mrb[0].mxu0
    %v1686 = vpop.f32.mrb[0].mxu0
    %v1687 = vpop.f32.mrb[0].mxu0
    %1688 = vdwg.mxu0
    %v1690 = vsel %vm1545, %v1635, 0
    %v1693 = vsel %vm1645, %v1134, 0
    %1695 = vmatprep.subr.bf16.mxu0 0
    %1696 = vmatpush1.bf16.msra.mxu0 %v1693
    %1697 = vmatprep.subr.bf16.mxu0 0
    %1698 = vmatpush1.bf16.msra.mxu0 0
    %1699 = vmatprep.subr.bf16.mxu0 0
    %1700 = vmatpush1.bf16.msra.mxu0 0
    %1701 = vmatprep.subr.bf16.mxu0 0
    %1702 = vmatpush1.bf16.msra.mxu0 0
    %1703 = vmatprep.subr.bf16.mxu0 0
    %1704 = vmatpush1.bf16.msra.mxu0 0
    %1705 = vmatprep.subr.bf16.mxu0 0
    %1706 = vmatpush1.bf16.msra.mxu0 0
    %1707 = vmatprep.subr.bf16.mxu0 0
    %1708 = vmatpush1.bf16.msra.mxu0 0
    %1709 = vmatprep.subr.bf16.mxu0 0
    %1710 = vmatpush1.bf16.msra.mxu0 0
    %1711 = vmatprep.subr.bf16.mxu0 0
    %1712 = vmatpush1.bf16.msra.mxu0 0
    %1713 = vmatprep.subr.bf16.mxu0 0
    %1714 = vmatpush1.bf16.msra.mxu0 0
    %1715 = vmatprep.subr.bf16.mxu0 0
    %1716 = vmatpush1.bf16.msra.mxu0 0
    %1717 = vmatprep.subr.bf16.mxu0 0
    %1718 = vmatpush1.bf16.msra.mxu0 0
    %1719 = vmatprep.subr.bf16.mxu0 0
    %1720 = vmatpush1.bf16.msra.mxu0 0
    %1721 = vmatprep.subr.bf16.mxu0 0
    %1722 = vmatpush1.bf16.msra.mxu0 0
    %1723 = vmatprep.subr.bf16.mxu0 0
    %1724 = vmatpush1.bf16.msra.mxu0 0
    %1725 = vmatprep.subr.bf16.mxu0 0
    %1726 = vmatpush1.bf16.msra.mxu0 0
    %1727 = vmatprep.mubr.bf16.mxu0 0
    %1728 = vmatmul.mubr.bf16.gmra.mrb[0].mxu0 %v1690
    %v1729 = vpop.f32.mrb[0].mxu0
    %v1730 = vadd.f32 0.0, %v1729
    %v1731 = vpop.f32.mrb[0].mxu0
    %v1732 = vpop.f32.mrb[0].mxu0
    %v1733 = vpop.f32.mrb[0].mxu0
    %1734 = vdwg.mxu0
    %v1736 = vsel %vm1545, %v1636, 0
    %v1739 = vsel %vm1645, %v1137, 0
    %1741 = vmatprep.subr.bf16.mxu0 0
    %1742 = vmatpush1.bf16.msra.mxu0 %v1739
    %1743 = vmatprep.subr.bf16.mxu0 0
    %1744 = vmatpush1.bf16.msra.mxu0 0
    %1745 = vmatprep.subr.bf16.mxu0 0
    %1746 = vmatpush1.bf16.msra.mxu0 0
    %1747 = vmatprep.subr.bf16.mxu0 0
    %1748 = vmatpush1.bf16.msra.mxu0 0
    %1749 = vmatprep.subr.bf16.mxu0 0
    %1750 = vmatpush1.bf16.msra.mxu0 0
    %1751 = vmatprep.subr.bf16.mxu0 0
    %1752 = vmatpush1.bf16.msra.mxu0 0
    %1753 = vmatprep.subr.bf16.mxu0 0
    %1754 = vmatpush1.bf16.msra.mxu0 0
    %1755 = vmatprep.subr.bf16.mxu0 0
    %1756 = vmatpush1.bf16.msra.mxu0 0
    %1757 = vmatprep.subr.bf16.mxu0 0
    %1758 = vmatpush1.bf16.msra.mxu0 0
    %1759 = vmatprep.subr.bf16.mxu0 0
    %1760 = vmatpush1.bf16.msra.mxu0 0
    %1761 = vmatprep.subr.bf16.mxu0 0
    %1762 = vmatpush1.bf16.msra.mxu0 0
    %1763 = vmatprep.subr.bf16.mxu0 0
    %1764 = vmatpush1.bf16.msra.mxu0 0
    %1765 = vmatprep.subr.bf16.mxu0 0
    %1766 = vmatpush1.bf16.msra.mxu0 0
    %1767 = vmatprep.subr.bf16.mxu0 0
    %1768 = vmatpush1.bf16.msra.mxu0 0
    %1769 = vmatprep.subr.bf16.mxu0 0
    %1770 = vmatpush1.bf16.msra.mxu0 0
    %1771 = vmatprep.subr.bf16.mxu0 0
    %1772 = vmatpush1.bf16.msra.mxu0 0
    %1773 = vmatprep.mubr.bf16.mxu0 0
    %1774 = vmatmul.mubr.bf16.gmra.mrb[0].mxu0 %v1736
    %v1775 = vpop.f32.mrb[0].mxu0
    %v1776 = vadd.f32 0.0, %v1775
    %v1777 = vpop.f32.mrb[0].mxu0
    %v1778 = vpop.f32.mrb[0].mxu0
    %v1779 = vpop.f32.mrb[0].mxu0
    %1780 = vdwg.mxu0
    %v1782 = vsel %vm1545, %v1637, 0
    %v1785 = vsel %vm1645, %v1140, 0
    %1787 = vmatprep.subr.bf16.mxu0 0
    %1788 = vmatpush1.bf16.msra.mxu0 %v1785
    %1789 = vmatprep.subr.bf16.mxu0 0
    %1790 = vmatpush1.bf16.msra.mxu0 0
    %1791 = vmatprep.subr.bf16.mxu0 0
    %1792 = vmatpush1.bf16.msra.mxu0 0
    %1793 = vmatprep.subr.bf16.mxu0 0
    %1794 = vmatpush1.bf16.msra.mxu0 0
    %1795 = vmatprep.subr.bf16.mxu0 0
    %1796 = vmatpush1.bf16.msra.mxu0 0
    %1797 = vmatprep.subr.bf16.mxu0 0
    %1798 = vmatpush1.bf16.msra.mxu0 0
    %1799 = vmatprep.subr.bf16.mxu0 0
    %1800 = vmatpush1.bf16.msra.mxu0 0
    %1801 = vmatprep.subr.bf16.mxu0 0
    %1802 = vmatpush1.bf16.msra.mxu0 0
    %1803 = vmatprep.subr.bf16.mxu0 0
    %1804 = vmatpush1.bf16.msra.mxu0 0
    %1805 = vmatprep.subr.bf16.mxu0 0
    %1806 = vmatpush1.bf16.msra.mxu0 0
    %1807 = vmatprep.subr.bf16.mxu0 0
    %1808 = vmatpush1.bf16.msra.mxu0 0
    %1809 = vmatprep.subr.bf16.mxu0 0
    %1810 = vmatpush1.bf16.msra.mxu0 0
    %1811 = vmatprep.subr.bf16.mxu0 0
    %1812 = vmatpush1.bf16.msra.mxu0 0
    %1813 = vmatprep.subr.bf16.mxu0 0
    %1814 = vmatpush1.bf16.msra.mxu0 0
    %1815 = vmatprep.subr.bf16.mxu0 0
    %1816 = vmatpush1.bf16.msra.mxu0 0
    %1817 = vmatprep.subr.bf16.mxu0 0
    %1818 = vmatpush1.bf16.msra.mxu0 0
    %1819 = vmatprep.mubr.bf16.mxu0 0
    %1820 = vmatmul.mubr.bf16.gmra.mrb[0].mxu0 %v1782
    %v1821 = vpop.f32.mrb[0].mxu0
    %v1822 = vadd.f32 0.0, %v1821
    %v1823 = vpop.f32.mrb[0].mxu0
    %v1824 = vpop.f32.mrb[0].mxu0
    %v1825 = vpop.f32.mrb[0].mxu0
    %1826 = vdwg.mxu0
    %v1828 = vsel %vm1545, %v1638, 0
    %v1831 = vsel %vm1645, %v1143, 0
    %1833 = vmatprep.subr.bf16.mxu0 0
    %1834 = vmatpush1.bf16.msra.mxu0 %v1831
    %1835 = vmatprep.subr.bf16.mxu0 0
    %1836 = vmatpush1.bf16.msra.mxu0 0
    %1837 = vmatprep.subr.bf16.mxu0 0
    %1838 = vmatpush1.bf16.msra.mxu0 0
    %1839 = vmatprep.subr.bf16.mxu0 0
    %1840 = vmatpush1.bf16.msra.mxu0 0
    %1841 = vmatprep.subr.bf16.mxu0 0
    %1842 = vmatpush1.bf16.msra.mxu0 0
    %1843 = vmatprep.subr.bf16.mxu0 0
    %1844 = vmatpush1.bf16.msra.mxu0 0
    %1845 = vmatprep.subr.bf16.mxu0 0
    %1846 = vmatpush1.bf16.msra.mxu0 0
    %1847 = vmatprep.subr.bf16.mxu0 0
    %1848 = vmatpush1.bf16.msra.mxu0 0
    %1849 = vmatprep.subr.bf16.mxu0 0
    %1850 = vmatpush1.bf16.msra.mxu0 0
    %1851 = vmatprep.subr.bf16.mxu0 0
    %1852 = vmatpush1.bf16.msra.mxu0 0
    %1853 = vmatprep.subr.bf16.mxu0 0
    %1854 = vmatpush1.bf16.msra.mxu0 0
    %1855 = vmatprep.subr.bf16.mxu0 0
    %1856 = vmatpush1.bf16.msra.mxu0 0
    %1857 = vmatprep.subr.bf16.mxu0 0
    %1858 = vmatpush1.bf16.msra.mxu0 0
    %1859 = vmatprep.subr.bf16.mxu0 0
    %1860 = vmatpush1.bf16.msra.mxu0 0
    %1861 = vmatprep.subr.bf16.mxu0 0
    %1862 = vmatpush1.bf16.msra.mxu0 0
    %1863 = vmatprep.subr.bf16.mxu0 0
    %1864 = vmatpush1.bf16.msra.mxu0 0
    %1865 = vmatprep.mubr.bf16.mxu0 0
    %1866 = vmatmul.mubr.bf16.gmra.mrb[0].mxu0 %v1828
    %v1867 = vpop.f32.mrb[0].mxu0
    %v1868 = vadd.f32 0.0, %v1867
    %v1869 = vpop.f32.mrb[0].mxu0
    %v1870 = vpop.f32.mrb[0].mxu0
    %v1871 = vpop.f32.mrb[0].mxu0
    %1872 = vdwg.mxu0
    %v1874 = vsel %vm1545, %v1639, 0
    %v1877 = vsel %vm1645, %v1146, 0
    %1879 = vmatprep.subr.bf16.mxu0 0
    %1880 = vmatpush1.bf16.msra.mxu0 %v1877
    %1881 = vmatprep.subr.bf16.mxu0 0
    %1882 = vmatpush1.bf16.msra.mxu0 0
    %1883 = vmatprep.subr.bf16.mxu0 0
    %1884 = vmatpush1.bf16.msra.mxu0 0
    %1885 = vmatprep.subr.bf16.mxu0 0
    %1886 = vmatpush1.bf16.msra.mxu0 0
    %1887 = vmatprep.subr.bf16.mxu0 0
    %1888 = vmatpush1.bf16.msra.mxu0 0
    %1889 = vmatprep.subr.bf16.mxu0 0
    %1890 = vmatpush1.bf16.msra.mxu0 0
    %1891 = vmatprep.subr.bf16.mxu0 0
    %1892 = vmatpush1.bf16.msra.mxu0 0
    %1893 = vmatprep.subr.bf16.mxu0 0
    %1894 = vmatpush1.bf16.msra.mxu0 0
    %1895 = vmatprep.subr.bf16.mxu0 0
    %1896 = vmatpush1.bf16.msra.mxu0 0
    %1897 = vmatprep.subr.bf16.mxu0 0
    %1898 = vmatpush1.bf16.msra.mxu0 0
    %1899 = vmatprep.subr.bf16.mxu0 0
    %1900 = vmatpush1.bf16.msra.mxu0 0
    %1901 = vmatprep.subr.bf16.mxu0 0
    %1902 = vmatpush1.bf16.msra.mxu0 0
    %1903 = vmatprep.subr.bf16.mxu0 0
    %1904 = vmatpush1.bf16.msra.mxu0 0
    %1905 = vmatprep.subr.bf16.mxu0 0
    %1906 = vmatpush1.bf16.msra.mxu0 0
    %1907 = vmatprep.subr.bf16.mxu0 0
    %1908 = vmatpush1.bf16.msra.mxu0 0
    %1909 = vmatprep.subr.bf16.mxu0 0
    %1910 = vmatpush1.bf16.msra.mxu0 0
    %1911 = vmatprep.mubr.bf16.mxu0 0
    %1912 = vmatmul.mubr.bf16.gmra.mrb[0].mxu0 %v1874
    %v1913 = vpop.f32.mrb[0].mxu0
    %v1914 = vadd.f32 0.0, %v1913
    %v1915 = vpop.f32.mrb[0].mxu0
    %v1916 = vpop.f32.mrb[0].mxu0
    %v1917 = vpop.f32.mrb[0].mxu0
    %1918 = vdwg.mxu0
    %v1920 = vsel %vm1545, %v1640, 0
    %v1923 = vsel %vm1645, %v1149, 0
    %1925 = vmatprep.subr.bf16.mxu0 0
    %1926 = vmatpush1.bf16.msra.mxu0 %v1923
    %1927 = vmatprep.subr.bf16.mxu0 0
    %1928 = vmatpush1.bf16.msra.mxu0 0
    %1929 = vmatprep.subr.bf16.mxu0 0
    %1930 = vmatpush1.bf16.msra.mxu0 0
    %1931 = vmatprep.subr.bf16.mxu0 0
    %1932 = vmatpush1.bf16.msra.mxu0 0
    %1933 = vmatprep.subr.bf16.mxu0 0
    %1934 = vmatpush1.bf16.msra.mxu0 0
    %1935 = vmatprep.subr.bf16.mxu0 0
    %1936 = vmatpush1.bf16.msra.mxu0 0
    %1937 = vmatprep.subr.bf16.mxu0 0
    %1938 = vmatpush1.bf16.msra.mxu0 0
    %1939 = vmatprep.subr.bf16.mxu0 0
    %1940 = vmatpush1.bf16.msra.mxu0 0
    %1941 = vmatprep.subr.bf16.mxu0 0
    %1942 = vmatpush1.bf16.msra.mxu0 0
    %1943 = vmatprep.subr.bf16.mxu0 0
    %1944 = vmatpush1.bf16.msra.mxu0 0
    %1945 = vmatprep.subr.bf16.mxu0 0
    %1946 = vmatpush1.bf16.msra.mxu0 0
    %1947 = vmatprep.subr.bf16.mxu0 0
    %1948 = vmatpush1.bf16.msra.mxu0 0
    %1949 = vmatprep.subr.bf16.mxu0 0
    %1950 = vmatpush1.bf16.msra.mxu0 0
    %1951 = vmatprep.subr.bf16.mxu0 0
    %1952 = vmatpush1.bf16.msra.mxu0 0
    %1953 = vmatprep.subr.bf16.mxu0 0
    %1954 = vmatpush1.bf16.msra.mxu0 0
    %1955 = vmatprep.subr.bf16.mxu0 0
    %1956 = vmatpush1.bf16.msra.mxu0 0
    %1957 = vmatprep.mubr.bf16.mxu0 0
    %1958 = vmatmul.mubr.bf16.gmra.mrb[0].mxu0 %v1920
    %v1959 = vpop.f32.mrb[0].mxu0
    %v1960 = vadd.f32 0.0, %v1959
    %v1961 = vpop.f32.mrb[0].mxu0
    %v1962 = vpop.f32.mrb[0].mxu0
    %v1963 = vpop.f32.mrb[0].mxu0
    %1964 = vdwg.mxu0
    %v1966 = vsel %vm1545, %v1641, 0
    %v1969 = vsel %vm1645, %v1152, 0
    %1971 = vmatprep.subr.bf16.mxu0 0
    %1972 = vmatpush1.bf16.msra.mxu0 %v1969
    %1973 = vmatprep.subr.bf16.mxu0 0
    %1974 = vmatpush1.bf16.msra.mxu0 0
    %1975 = vmatprep.subr.bf16.mxu0 0
    %1976 = vmatpush1.bf16.msra.mxu0 0
    %1977 = vmatprep.subr.bf16.mxu0 0
    %1978 = vmatpush1.bf16.msra.mxu0 0
    %1979 = vmatprep.subr.bf16.mxu0 0
    %1980 = vmatpush1.bf16.msra.mxu0 0
    %1981 = vmatprep.subr.bf16.mxu0 0
    %1982 = vmatpush1.bf16.msra.mxu0 0
    %1983 = vmatprep.subr.bf16.mxu0 0
    %1984 = vmatpush1.bf16.msra.mxu0 0
    %1985 = vmatprep.subr.bf16.mxu0 0
    %1986 = vmatpush1.bf16.msra.mxu0 0
    %1987 = vmatprep.subr.bf16.mxu0 0
    %1988 = vmatpush1.bf16.msra.mxu0 0
    %1989 = vmatprep.subr.bf16.mxu0 0
    %1990 = vmatpush1.bf16.msra.mxu0 0
    %1991 = vmatprep.subr.bf16.mxu0 0
    %1992 = vmatpush1.bf16.msra.mxu0 0
    %1993 = vmatprep.subr.bf16.mxu0 0
    %1994 = vmatpush1.bf16.msra.mxu0 0
    %1995 = vmatprep.subr.bf16.mxu0 0
    %1996 = vmatpush1.bf16.msra.mxu0 0
    %1997 = vmatprep.subr.bf16.mxu0 0
    %1998 = vmatpush1.bf16.msra.mxu0 0
    %1999 = vmatprep.subr.bf16.mxu0 0
    %2000 = vmatpush1.bf16.msra.mxu0 0
    %2001 = vmatprep.subr.bf16.mxu0 0
    %2002 = vmatpush1.bf16.msra.mxu0 0
    %2003 = vmatprep.mubr.bf16.mxu0 0
    %2004 = vmatmul.mubr.bf16.gmra.mrb[0].mxu0 %v1966
    %v2005 = vpop.f32.mrb[0].mxu0
    %v2006 = vadd.f32 0.0, %v2005
    %v2007 = vpop.f32.mrb[0].mxu0
    %v2008 = vpop.f32.mrb[0].mxu0
    %v2009 = vpop.f32.mrb[0].mxu0
    %2010 = vdwg.mxu0
    %v2011 = vcombine.low %v1684, %v1776
    %v2012 = vcombine.high %v1684, %v1776
    %v2014 = vunpack.c.l.s4 1983009808
    %v2015 = vunpack.c.0.s8 %v2014
    %v2016 = vlaneseq
    %v2017 = vshrl.u32 %v2016, 7
    %v2018 = vsub.s32 %v2015, %v2017
    %v2019 = vrot.slane %v2011, %v2018
    %v2021 = vunpack.c.l.s4 1983009808
    %v2022 = vunpack.c.0.s8 %v2021
    %v2023 = vlaneseq
    %v2024 = vshrl.u32 %v2023, 7
    %v2025 = vsub.s32 %v2022, %v2024
    %v2026 = vrot.slane %v2012, %v2025
    %v2027 = vcombine.low %v1730, %v1822
    %v2028 = vcombine.high %v1730, %v1822
    %v2030 = vunpack.c.l.s4 1983009808
    %v2031 = vunpack.c.0.s8 %v2030
    %v2032 = vlaneseq
    %v2033 = vshrl.u32 %v2032, 7
    %v2034 = vsub.s32 %v2031, %v2033
    %v2035 = vrot.slane %v2027, %v2034
    %v2037 = vunpack.c.l.s4 1983009808
    %v2038 = vunpack.c.0.s8 %v2037
    %v2039 = vlaneseq
    %v2040 = vshrl.u32 %v2039, 7
    %v2041 = vsub.s32 %v2038, %v2040
    %v2042 = vrot.slane %v2028, %v2041
    %v2043 = vcombine.low %v2019, %v2035
    %v2044 = vcombine.high %v2019, %v2035
    %v2046 = vunpack.c.l.s4 1934713408
    %v2047 = vunpack.c.0.s8 %v2046
    %v2048 = vlaneseq
    %v2049 = vshrl.u32 %v2048, 7
    %v2050 = vsub.s32 %v2047, %v2049
    %v2051 = vrot.slane %v2043, %v2050
    %v2053 = vunpack.c.l.s4 1934713408
    %v2054 = vunpack.c.0.s8 %v2053
    %v2055 = vlaneseq
    %v2056 = vshrl.u32 %v2055, 7
    %v2057 = vsub.s32 %v2054, %v2056
    %v2058 = vrot.slane %v2044, %v2057
    %v2059 = vcombine.low %v2026, %v2042
    %v2060 = vcombine.high %v2026, %v2042
    %v2062 = vunpack.c.l.s4 1934713408
    %v2063 = vunpack.c.0.s8 %v2062
    %v2064 = vlaneseq
    %v2065 = vshrl.u32 %v2064, 7
    %v2066 = vsub.s32 %v2063, %v2065
    %v2067 = vrot.slane %v2059, %v2066
    %v2069 = vunpack.c.l.s4 1934713408
    %v2070 = vunpack.c.0.s8 %v2069
    %v2071 = vlaneseq
    %v2072 = vshrl.u32 %v2071, 7
    %v2073 = vsub.s32 %v2070, %v2072
    %v2074 = vrot.slane %v2060, %v2073
    %v2075 = vcombine.high %v2051, 0.0
    %v2076 = vcombine.high %v2058, 0.0
    %v2077 = vcombine.high %v2067, 0.0
    %v2078 = vcombine.high %v2074, 0.0
    %v2079 = vcombine.low %v1868, %v1960
    %v2080 = vcombine.high %v1868, %v1960
    %v2082 = vunpack.c.l.s4 1983009808
    %v2083 = vunpack.c.0.s8 %v2082
    %v2084 = vlaneseq
    %v2085 = vshrl.u32 %v2084, 7
    %v2086 = vsub.s32 %v2083, %v2085
    %v2087 = vrot.slane %v2079, %v2086
    %v2089 = vunpack.c.l.s4 1983009808
    %v2090 = vunpack.c.0.s8 %v2089
    %v2091 = vlaneseq
    %v2092 = vshrl.u32 %v2091, 7
    %v2093 = vsub.s32 %v2090, %v2092
    %v2094 = vrot.slane %v2080, %v2093
    %v2095 = vcombine.low %v1914, %v2006
    %v2096 = vcombine.high %v1914, %v2006
    %v2098 = vunpack.c.l.s4 1983009808
    %v2099 = vunpack.c.0.s8 %v2098
    %v2100 = vlaneseq
    %v2101 = vshrl.u32 %v2100, 7
    %v2102 = vsub.s32 %v2099, %v2101
    %v2103 = vrot.slane %v2095, %v2102
    %v2105 = vunpack.c.l.s4 1983009808
    %v2106 = vunpack.c.0.s8 %v2105
    %v2107 = vlaneseq
    %v2108 = vshrl.u32 %v2107, 7
    %v2109 = vsub.s32 %v2106, %v2108
    %v2110 = vrot.slane %v2096, %v2109
    %v2111 = vcombine.low %v2087, %v2103
    %v2112 = vcombine.high %v2087, %v2103
    %v2114 = vunpack.c.l.s4 1934713408
    %v2115 = vunpack.c.0.s8 %v2114
    %v2116 = vlaneseq
    %v2117 = vshrl.u32 %v2116, 7
    %v2118 = vsub.s32 %v2115, %v2117
    %v2119 = vrot.slane %v2111, %v2118
    %v2121 = vunpack.c.l.s4 1934713408
    %v2122 = vunpack.c.0.s8 %v2121
    %v2123 = vlaneseq
    %v2124 = vshrl.u32 %v2123, 7
    %v2125 = vsub.s32 %v2122, %v2124
    %v2126 = vrot.slane %v2112, %v2125
    %v2127 = vcombine.low %v2094, %v2110
    %v2128 = vcombine.high %v2094, %v2110
    %v2130 = vunpack.c.l.s4 1934713408
    %v2131 = vunpack.c.0.s8 %v2130
    %v2132 = vlaneseq
    %v2133 = vshrl.u32 %v2132, 7
    %v2134 = vsub.s32 %v2131, %v2133
    %v2135 = vrot.slane %v2127, %v2134
    %v2137 = vunpack.c.l.s4 1934713408
    %v2138 = vunpack.c.0.s8 %v2137
    %v2139 = vlaneseq
    %v2140 = vshrl.u32 %v2139, 7
    %v2141 = vsub.s32 %v2138, %v2140
    %v2142 = vrot.slane %v2128, %v2141
    %v2143 = vcombine.high %v2119, 0.0
    %v2144 = vcombine.high %v2126, 0.0
    %v2145 = vcombine.high %v2135, 0.0
    %v2146 = vcombine.high %v2142, 0.0
    %v2147 = vcombine.low %v2051, %v2058
    %v2149 = vunpack.c.l.s4 1983009808
    %v2150 = vunpack.c.0.s8 %v2149
    %v2151 = vlaneseq
    %v2152 = vshrl.u32 %v2151, 7
    %v2153 = vsub.s32 %v2150, %v2152
    %v2154 = vrot.slane %v2147, %v2153
    %v2155 = vcombine.low %v2075, %v2076
    %v2157 = vunpack.c.l.s4 1983009808
    %v2158 = vunpack.c.0.s8 %v2157
    %v2159 = vlaneseq
    %v2160 = vshrl.u32 %v2159, 7
    %v2161 = vsub.s32 %v2158, %v2160
    %v2162 = vrot.slane %v2155, %v2161
    %v2163 = vcombine.low %v2067, %v2074
    %v2165 = vunpack.c.l.s4 1983009808
    %v2166 = vunpack.c.0.s8 %v2165
    %v2167 = vlaneseq
    %v2168 = vshrl.u32 %v2167, 7
    %v2169 = vsub.s32 %v2166, %v2168
    %v2170 = vrot.slane %v2163, %v2169
    %v2171 = vcombine.low %v2077, %v2078
    %v2173 = vunpack.c.l.s4 1983009808
    %v2174 = vunpack.c.0.s8 %v2173
    %v2175 = vlaneseq
    %v2176 = vshrl.u32 %v2175, 7
    %v2177 = vsub.s32 %v2174, %v2176
    %v2178 = vrot.slane %v2171, %v2177
    %v2179 = vcombine.low %v2154, %v2162
    %v2180 = vcombine.high %v2154, %v2162
    %v2182 = vunpack.c.l.s4 1934713408
    %v2183 = vunpack.c.0.s8 %v2182
    %v2184 = vlaneseq
    %v2185 = vshrl.u32 %v2184, 7
    %v2186 = vsub.s32 %v2183, %v2185
    %v2187 = vrot.slane %v2179, %v2186
    %v2189 = vunpack.c.l.s4 1934713408
    %v2190 = vunpack.c.0.s8 %v2189
    %v2191 = vlaneseq
    %v2192 = vshrl.u32 %v2191, 7
    %v2193 = vsub.s32 %v2190, %v2192
    %v2194 = vrot.slane %v2180, %v2193
    %v2195 = vcombine.low %v2170, %v2178
    %v2196 = vcombine.high %v2170, %v2178
    %v2198 = vunpack.c.l.s4 1934713408
    %v2199 = vunpack.c.0.s8 %v2198
    %v2200 = vlaneseq
    %v2201 = vshrl.u32 %v2200, 7
    %v2202 = vsub.s32 %v2199, %v2201
    %v2203 = vrot.slane %v2195, %v2202
    %v2205 = vunpack.c.l.s4 1934713408
    %v2206 = vunpack.c.0.s8 %v2205
    %v2207 = vlaneseq
    %v2208 = vshrl.u32 %v2207, 7
    %v2209 = vsub.s32 %v2206, %v2208
    %v2210 = vrot.slane %v2196, %v2209
    %v2211 = vcombine.low %v2187, %v2203
    %v2212 = vcombine.high %v2187, %v2203
    %v2213 = vcombine.low %v2194, %v2210
    %v2214 = vcombine.high %v2194, %v2210
    %v2215 = vcombine.low %v2119, %v2126
    %v2217 = vunpack.c.l.s4 1983009808
    %v2218 = vunpack.c.0.s8 %v2217
    %v2219 = vlaneseq
    %v2220 = vshrl.u32 %v2219, 7
    %v2221 = vsub.s32 %v2218, %v2220
    %v2222 = vrot.slane %v2215, %v2221
    %v2223 = vcombine.low %v2143, %v2144
    %v2225 = vunpack.c.l.s4 1983009808
    %v2226 = vunpack.c.0.s8 %v2225
    %v2227 = vlaneseq
    %v2228 = vshrl.u32 %v2227, 7
    %v2229 = vsub.s32 %v2226, %v2228
    %v2230 = vrot.slane %v2223, %v2229
    %v2231 = vcombine.low %v2135, %v2142
    %v2233 = vunpack.c.l.s4 1983009808
    %v2234 = vunpack.c.0.s8 %v2233
    %v2235 = vlaneseq
    %v2236 = vshrl.u32 %v2235, 7
    %v2237 = vsub.s32 %v2234, %v2236
    %v2238 = vrot.slane %v2231, %v2237
    %v2239 = vcombine.low %v2145, %v2146
    %v2241 = vunpack.c.l.s4 1983009808
    %v2242 = vunpack.c.0.s8 %v2241
    %v2243 = vlaneseq
    %v2244 = vshrl.u32 %v2243, 7
    %v2245 = vsub.s32 %v2242, %v2244
    %v2246 = vrot.slane %v2239, %v2245
    %v2247 = vcombine.low %v2222, %v2230
    %v2248 = vcombine.high %v2222, %v2230
    %v2250 = vunpack.c.l.s4 1934713408
    %v2251 = vunpack.c.0.s8 %v2250
    %v2252 = vlaneseq
    %v2253 = vshrl.u32 %v2252, 7
    %v2254 = vsub.s32 %v2251, %v2253
    %v2255 = vrot.slane %v2247, %v2254
    %v2257 = vunpack.c.l.s4 1934713408
    %v2258 = vunpack.c.0.s8 %v2257
    %v2259 = vlaneseq
    %v2260 = vshrl.u32 %v2259, 7
    %v2261 = vsub.s32 %v2258, %v2260
    %v2262 = vrot.slane %v2248, %v2261
    %v2263 = vcombine.low %v2238, %v2246
    %v2264 = vcombine.high %v2238, %v2246
    %v2266 = vunpack.c.l.s4 1934713408
    %v2267 = vunpack.c.0.s8 %v2266
    %v2268 = vlaneseq
    %v2269 = vshrl.u32 %v2268, 7
    %v2270 = vsub.s32 %v2267, %v2269
    %v2271 = vrot.slane %v2263, %v2270
    %v2273 = vunpack.c.l.s4 1934713408
    %v2274 = vunpack.c.0.s8 %v2273
    %v2275 = vlaneseq
    %v2276 = vshrl.u32 %v2275, 7
    %v2277 = vsub.s32 %v2274, %v2276
    %v2278 = vrot.slane %v2264, %v2277
    %v2279 = vcombine.low %v2255, %v2271
    %v2280 = vcombine.high %v2255, %v2271
    %v2281 = vcombine.low %v2262, %v2278
    %v2282 = vcombine.high %v2262, %v2278
    %2285 = vrot.lane.b32.xlu0 %v2212, 32
    %v2286 = vpop.permute.xlu0 %2285
    %2287 = vrot.lane.b32.xlu0 %v2280, 32
    %v2288 = vpop.permute.xlu0 %2287
    %2293 = vrot.lane.b32.xlu0 %v2213, 64
    %v2294 = vpop.permute.xlu0 %2293
    %2295 = vrot.lane.b32.xlu0 %v2281, 64
    %v2296 = vpop.permute.xlu0 %2295
    %2301 = vrot.lane.b32.xlu0 %v2214, 96
    %v2302 = vpop.permute.xlu0 %2301
    %2303 = vrot.lane.b32.xlu0 %v2282, 96
    %v2304 = vpop.permute.xlu0 %2303
    %v2307 = vsel %vm1153, %v2211, %v2286
    %v2308 = vsel %vm1153, %v2279, %v2288
    %vm2309 = vcmask 523264
    %v2310 = vsel %vm2309, %v2307, %v2294
    %v2311 = vsel %vm2309, %v2308, %v2296
    %vm2312 = vcmask 785408
    %v2313 = vsel %vm2312, %v2310, %v2302
    %v2314 = vsel %vm2312, %v2311, %v2304
    %v2315 = vpack.c.bf16 %v2314, %v2313
    %v2316 = vld [vmem:[#allocation7] sm:$0xf]
    %v2317 = vld [vmem:[#allocation7 + $0x4] sm:$0xf]
    %v2318 = vld [vmem:[#allocation7 + $0x8] sm:$0xf]
    %v2319 = vld [vmem:[#allocation7 + $0xc] sm:$0xf]
    %v2320 = vld [vmem:[#allocation7 + $0x10] sm:$0xf]
    %v2321 = vld [vmem:[#allocation7 + $0x14] sm:$0xf]
    %v2322 = vld [vmem:[#allocation7 + $0x18] sm:$0xf]
    %v2323 = vld [vmem:[#allocation7 + $0x1c] sm:$0xf]
    %v2324 = vld [vmem:[#allocation7 + $0x20] sm:$0xf]
    %v2325 = vld [vmem:[#allocation7 + $0x24] sm:$0xf]
    %v2326 = vld [vmem:[#allocation7 + $0x28] sm:$0xf]
    %v2327 = vld [vmem:[#allocation7 + $0x2c] sm:$0xf]
    %v2328 = vld [vmem:[#allocation7 + $0x30] sm:$0xf]
    %v2329 = vld [vmem:[#allocation7 + $0x34] sm:$0xf]
    %v2330 = vld [vmem:[#allocation7 + $0x38] sm:$0xf]
    %v2331 = vld [vmem:[#allocation7 + $0x3c] sm:$0xf]
    %v2332 = vld [vmem:[%s3] sm:$0x1]
    %v2334 = vlaneseq
    %v2335 = vshrl.u32 %v2334, 7
    %v2336 = vsub.s32 0, %v2335
    %v2337 = vrot.slane %v2332, %v2336
    %v2355 = vunpack.c.l.b16 %v2316
    %v2356 = vunpack.c.l.b16 %v2317
    %v2357 = vunpack.c.l.b16 %v2318
    %v2358 = vunpack.c.l.b16 %v2319
    %v2359 = vunpack.c.l.b16 %v2320
    %v2360 = vunpack.c.l.b16 %v2321
    %v2361 = vunpack.c.l.b16 %v2322
    %v2362 = vunpack.c.l.b16 %v2323
    %v2363 = vunpack.c.l.b16 %v2324
    %v2364 = vunpack.c.l.b16 %v2325
    %v2365 = vunpack.c.l.b16 %v2326
    %v2366 = vunpack.c.l.b16 %v2327
    %v2367 = vunpack.c.l.b16 %v2328
    %v2368 = vunpack.c.l.b16 %v2329
    %v2369 = vunpack.c.l.b16 %v2330
    %v2370 = vunpack.c.l.b16 %v2331
    %v2371 = vpack.c.b16 %v2356, %v2355
    %v2372 = vpack.c.b16 %v2358, %v2357
    %v2373 = vpack.c.b16 %v2360, %v2359
    %v2374 = vpack.c.b16 %v2362, %v2361
    %v2375 = vpack.c.b16 %v2364, %v2363
    %v2376 = vpack.c.b16 %v2366, %v2365
    %v2377 = vpack.c.b16 %v2368, %v2367
    %v2378 = vpack.c.b16 %v2370, %v2369
    %2387 = vmatprep.subr.bf16.mxu0 0
    %2388 = vmatpush1.bf16.msra.mxu0 %v2371
    %2389 = vmatprep.subr.bf16.mxu0 0
    %2390 = vmatpush1.bf16.msra.mxu0 %v2372
    %2391 = vmatprep.subr.bf16.mxu0 0
    %2392 = vmatpush1.bf16.msra.mxu0 %v2373
    %2393 = vmatprep.subr.bf16.mxu0 0
    %2394 = vmatpush1.bf16.msra.mxu0 %v2374
    %2395 = vmatprep.subr.bf16.mxu0 0
    %2396 = vmatpush1.bf16.msra.mxu0 %v2375
    %2397 = vmatprep.subr.bf16.mxu0 0
    %2398 = vmatpush1.bf16.msra.mxu0 %v2376
    %2399 = vmatprep.subr.bf16.mxu0 0
    %2400 = vmatpush1.bf16.msra.mxu0 %v2377
    %2401 = vmatprep.subr.bf16.mxu0 0
    %2402 = vmatpush1.bf16.msra.mxu0 %v2378
    %2403 = vmatprep.subr.bf16.mxu0 0
    %2404 = vmatpush1.bf16.msra.mxu0 0
    %2405 = vmatprep.subr.bf16.mxu0 0
    %2406 = vmatpush1.bf16.msra.mxu0 0
    %2407 = vmatprep.subr.bf16.mxu0 0
    %2408 = vmatpush1.bf16.msra.mxu0 0
    %2409 = vmatprep.subr.bf16.mxu0 0
    %2410 = vmatpush1.bf16.msra.mxu0 0
    %2411 = vmatprep.subr.bf16.mxu0 0
    %2412 = vmatpush1.bf16.msra.mxu0 0
    %2413 = vmatprep.subr.bf16.mxu0 0
    %2414 = vmatpush1.bf16.msra.mxu0 0
    %2415 = vmatprep.subr.bf16.mxu0 0
    %2416 = vmatpush1.bf16.msra.mxu0 0
    %2417 = vmatprep.subr.bf16.mxu0 0
    %2418 = vmatpush1.bf16.msra.mxu0 0
    %2419 = vmatprep.mubr.bf16.mxu0 0
    %2420 = vmatmul.mubr.bf16.gmra.mrb[0].mxu0 %v2315
    %v2421 = vpop.f32.mrb[0].mxu0
    %v2422 = vadd.f32 %v2337, %v2421
    %v2423 = vpop.f32.mrb[0].mxu0
    %v2424 = vpop.f32.mrb[0].mxu0
    %v2425 = vadd.f32 %v2337, %v2424
    %v2426 = vpop.f32.mrb[0].mxu0
    %2427 = vdwg.mxu0
    %2428 = vst [vmem:[#allocation8] sm:$0xff] %v2422
    %2429 = vst [vmem:[#allocation8 + $0x8] sm:$0xff] %v2425
    // Predicated region
    $region30: #{multi_head_v2.1} parent=1 // pred_check
      _
    $region31: #{multi_head_v2.1} parent=1 // pred_check_branch
      %2431 = sbr.rel (0) target = $region33
    $region32: #{multi_head_v2.1} parent=1 // pred_region
      %s2433 = ssub.s32 256, 256
      %2434 = vsyncadd [#allocation4], %s2433
      %s2435 = sshll.u32 [#allocation8], 4
      %s2436 = int_to_ptr.vmem [resolvable:$true] %s2435
      %2441 = dma.vmem_to_hbm [thread:$0]  %s2436, 256, %s4, [#allocation4], 128, 128, 8
    $region33: #{multi_head_v2.1} parent=1 // pred_fallthru
      _
    // Predicated region
    $region34: #{multi_head_v2.1} parent=1 // pred_check
      _
    $region35: #{multi_head_v2.1} parent=1 // pred_check_branch
      %2443 = sbr.rel (0) target = $region37
    $region36: #{multi_head_v2.1} parent=1 // pred_region
      %2444 = dma.done [#allocation4], 256
    $region37: #{multi_head_v2.1} parent=1 // pred_fallthru
      _
    %2445 = vsyncpa [#allocation3], 1
    %2446 = vsyncpa [#allocation6], 1
    %2447 = vsyncpa [#allocation4], 1

</llo_original>
